<compile_context>
chip_gen: v7x
topology: tpu7x:2x2x1
jax: 0.10.0
libtpu: 0.0.40
codegen_flags: <defaults>
</compile_context>

<pallas_src>
import jax
import jax.numpy as jnp
from jax.experimental import pallas as pl
from jax.experimental.pallas import tpu as pltpu


def _round_up(x, m):
    return (x + m - 1) // m * m


def _vmem_bytes(shape, dtype):
    """Bytes of one VMEM-resident block, padded to the (8, 128) tile."""
    dims = list(shape) if len(shape) >= 2 else [1] * (2 - len(shape)) + list(shape)
    dims[-1] = _round_up(dims[-1], 128)
    dims[-2] = _round_up(dims[-2], 8)
    n = 1
    for d in dims:
        n *= d
    return n * jnp.dtype(dtype).itemsize


def _mha_kernel(row_ref, col_ref, bias_ref, qproj_ref, kvproj_ref, hred_ref, hexp_ref,
                acc_ref, l_ref, m_ref):
    f32 = jnp.float32
    bf16 = jnp.bfloat16
    neg_big = jnp.float32(-1e30)
    t = pl.program_id(0)
    n_nodes, hidden = qproj_ref.shape

    # ---- init running state on the first edge tile ----
    @pl.when(t == 0)
    def _init():
        m_ref[...] = jnp.full_like(m_ref, neg_big)
        l_ref[...] = jnp.zeros_like(l_ref)
        acc_ref[...] = jnp.zeros_like(acc_ref)

    # ---- per-edge-tile work ----
    row_idx = row_ref[...]                    # [TE, 1] int32 (padded edges: row == n_nodes)
    col_idx = col_ref[...]                    # [TE, 1] int32
    te = row_idx.shape[0]
    iota_n = jax.lax.broadcasted_iota(jnp.int32, (te, n_nodes), 1)
    row_oh = (iota_n == row_idx).astype(bf16)          # [TE, N] exact 0/1 (padded rows: all zero)
    col_oh = (iota_n == col_idx).astype(bf16)

    # Per-edge gathers on the MXU (K and V fused through the concatenated projection).
    q_e = jnp.dot(row_oh, qproj_ref[...], preferred_element_type=f32)       # [TE, hidden]
    kv_e = jnp.dot(col_oh, kvproj_ref[...], preferred_element_type=f32)     # [TE, 2*hidden]
    k_e = kv_e[:, :hidden]
    v_e = kv_e[:, hidden:]

    # Per-edge per-head scores, all in f32 head space (scale already folded into qproj).
    s_c = jnp.dot(q_e * k_e, hred_ref[...], preferred_element_type=f32) + bias_ref[...]  # [TE, H]
    s_c = jnp.where(row_idx < n_nodes, s_c, neg_big)   # padded edges contribute exp(-1e30)=0

    # Online softmax with a row-independent per-head running max (exact rescale; no
    # [TE, H, N] masked max, no per-edge max gather, single f32 precision for m everywhere).
    t_max = jnp.max(s_c, axis=0, keepdims=True)        # [1, H] tile-wide per-head max
    m_old = m_ref[...]                                 # [8, H] (all rows identical)
    m_new = jnp.maximum(m_old, t_max)
    m_ref[...] = m_new
    alpha = jnp.exp(m_old - m_new)                     # [8, H] rescale of the old state
    alpha_full = jnp.dot(alpha, hexp_ref[...], preferred_element_type=f32)   # [8, hidden] exact

    p = jnp.exp(s_c - m_new[0:1, :])                   # [TE, H] f32, args <= 0 (head-space EUP)
    p_full = jnp.dot(p, hexp_ref[...], preferred_element_type=f32)           # [TE, hidden] exact

    # Scatter the exp-sums (tiny) and the weighted values (bf16 MXU) back onto the rows.
    pv = (p_full * v_e).astype(bf16)                   # [TE, hidden]
    scat_acc = jax.lax.dot_general(row_oh, pv,
                                   dimension_numbers=(((0,), (0,)), ((), ())),
                                   preferred_element_type=f32)               # [N, hidden]
    scat_l = jax.lax.dot_general(row_oh, p.astype(bf16),
                                 dimension_numbers=(((0,), (0,)), ((), ())),
                                 preferred_element_type=f32)                 # [N, H]

    acc_ref[...] = alpha_full[0:1, :] * acc_ref[...] + scat_acc
    l_ref[...] = alpha[0:1, :] * l_ref[...] + scat_l


def multi_head_attention(q, k, v, attn_bias, sparse_row, sparse_col, params, head_size,
                         tile_e=512):
    """Pallas implementation of MultiHeadAttention.forward (dropout disabled)."""
    N, hidden = q.shape
    E = sparse_row.shape[0]
    att = hidden // head_size
    scale = float(att) ** (-0.5)
    f32, bf16 = jnp.float32, jnp.bfloat16

    wq, bq, wk, bk, wv, bv, wo, bo = params   # weights already [in, out] (= W^T of nn.Linear)

    # Dense projections hoisted out of the kernel (full-shape XLA matmuls); scale folded into Q.
    qproj = ((q.astype(f32) @ wq + bq) * scale).astype(bf16)                 # [N, hidden]
    kproj = k.astype(f32) @ wk + bk
    vproj = v.astype(f32) @ wv + bv
    kvproj = jnp.concatenate([kproj, vproj], axis=1).astype(bf16)            # [N, 2*hidden]

    # Exact 0/1 head reduce / expand matrices (per-head sum & broadcast on the MXU), kept f32
    # so the head<->hidden expansions inside the kernel are exact.
    head_of_col = jnp.arange(hidden, dtype=jnp.int32) // att
    heads = jnp.arange(head_size, dtype=jnp.int32)
    hred = (head_of_col[:, None] == heads[None, :]).astype(f32)   # [hidden, H]
    hexp = (heads[:, None] == head_of_col[None, :]).astype(f32)   # [H, hidden]

    # Tile & pad the edge list to MXU-friendly multiples of 128.  Padded edges point their row
    # at the out-of-range id N: their score is masked to -1e30 and their one-hot row is all
    # zeros, so they contribute nothing to max / sum / aggregate.
    tile_e = max(128, min(_round_up(int(tile_e), 128), _round_up(E, 128)))
    e_pad = _round_up(E, tile_e)
    n_tiles = e_pad // tile_e
    pad = e_pad - E
    row_i = sparse_row.astype(jnp.int32)
    col_i = sparse_col.astype(jnp.int32)
    bias_f = attn_bias.astype(f32)
    if pad:
        row_i = jnp.concatenate([row_i, jnp.full((pad,), N, jnp.int32)])
        col_i = jnp.concatenate([col_i, jnp.zeros((pad,), jnp.int32)])
        bias_f = jnp.concatenate([bias_f, jnp.zeros((pad, head_size), f32)], axis=0)
    row_2d = row_i.reshape(e_pad, 1)
    col_2d = col_i.reshape(e_pad, 1)

    def const(shape):
        return pl.BlockSpec(shape, lambda t: (0, 0))

    in_specs = [
        pl.BlockSpec((tile_e, 1), lambda t: (t, 0)),             # sparse_row tile
        pl.BlockSpec((tile_e, 1), lambda t: (t, 0)),             # sparse_col tile
        pl.BlockSpec((tile_e, head_size), lambda t: (t, 0)),     # attn_bias tile
        const((N, hidden)),                                      # qproj (bf16, scale folded)
        const((N, 2 * hidden)),                                  # [K | V] proj (bf16)
        const((hidden, head_size)),                              # head-reduce 0/1 (f32)
        const((head_size, hidden)),                              # head-expand 0/1 (f32)
    ]

    # VMEM budget from actual shapes (double-buffered inputs + resident outputs + scratch).
    vmem = 2 * (2 * _vmem_bytes((tile_e, 1), jnp.int32)
                + _vmem_bytes((tile_e, head_size), f32)
                + _vmem_bytes((N, hidden), bf16)
                + _vmem_bytes((N, 2 * hidden), bf16)
                + _vmem_bytes((hidden, head_size), f32)
                + _vmem_bytes((head_size, hidden), f32))
    vmem += 2 * (_vmem_bytes((N, hidden), f32) + _vmem_bytes((N, head_size), f32))
    vmem += _vmem_bytes((8, head_size), f32)
    vmem_limit = int(min(128 << 20, max(32 << 20, int(1.5 * vmem) + (4 << 20))))

    acc, l = pl.pallas_call(
        _mha_kernel,
        out_shape=(jax.ShapeDtypeStruct((N, hidden), f32),        # unnormalized aggregate
                   jax.ShapeDtypeStruct((N, head_size), f32)),    # per-head exp-sum
        grid=(n_tiles,),
        in_specs=in_specs,
        out_specs=(pl.BlockSpec((N, hidden), lambda t: (0, 0)),
                   pl.BlockSpec((N, head_size), lambda t: (0, 0))),
        scratch_shapes=[pltpu.VMEM((8, head_size), f32)],         # running per-head max (f32)
        compiler_params=pltpu.CompilerParams(
            dimension_semantics=("arbitrary",),
            vmem_limit_bytes=vmem_limit,
        ),
    )(row_2d, col_2d, bias_f, qproj, kvproj, hred, hexp)

    # Normalization + output projection hoisted out of the kernel (plain XLA).
    l_full = jnp.repeat(l, att, axis=1)                           # [N, hidden]
    agg = acc / (l_full + 1e-16)
    out = agg @ wo + bo
    return out.astype(q.dtype)


def reference_mha(q, k, v, attn_bias, sparse_row, sparse_col, params, head_size):
    """Pure-JAX reference matching the PyTorch forward semantics."""
    N, hidden = q.shape
    E = sparse_row.shape[0]
    d = hidden // head_size
    scale = float(d) ** (-0.5)
    wq, bq, wk, bk, wv, bv, wo, bo = params

    Q = (q @ wq + bq).reshape(N, head_size, d)
    K = (k @ wk + bk).reshape(N, head_size, d)
    V = (v @ wv + bv).reshape(N, head_size, d)

    scores = jnp.sum(Q[sparse_row] * K[sparse_col], axis=-1) * scale + attn_bias  # [E, H]
    row_max = jax.ops.segment_max(scores, sparse_row, num_segments=N)
    ex = jnp.exp(scores - row_max[sparse_row])
    row_sum = jax.ops.segment_sum(ex, sparse_row, num_segments=N)
    attn = ex / (row_sum[sparse_row] + 1e-16)
    weighted = (attn[:, :, None] * V[sparse_col]).reshape(E, hidden)
    agg = jax.ops.segment_sum(weighted, sparse_row, num_segments=N)
    return agg @ wo + bo


if __name__ == "__main__":
    key = jax.random.PRNGKey(0)
    N, hidden, head_size, E = 16, 32, 4, 300

    keys = jax.random.split(key, 16)
    q = jax.random.normal(keys[0], (N, hidden), jnp.float32)
    k = jax.random.normal(keys[1], (N, hidden), jnp.float32)
    v = jax.random.normal(keys[2], (N, hidden), jnp.float32)
    attn_bias = 0.1 * jax.random.normal(keys[3], (E, head_size), jnp.float32)
    sparse_row = jax.random.randint(keys[4], (E,), 0, N, jnp.int32)
    sparse_col = jax.random.randint(keys[5], (E,), 0, N, jnp.int32)

    # Deterministic synthetic parameters ([in, out] layout, i.e. W^T of nn.Linear).
    s = 0.1
    params = (
        s * jax.random.normal(keys[6], (hidden, hidden), jnp.float32),
        s * jax.random.normal(keys[7], (hidden,), jnp.float32),
        s * jax.random.normal(keys[8], (hidden, hidden), jnp.float32),
        s * jax.random.normal(keys[9], (hidden,), jnp.float32),
        s * jax.random.normal(keys[10], (hidden, hidden), jnp.float32),
        s * jax.random.normal(keys[11], (hidden,), jnp.float32),
        s * jax.random.normal(keys[12], (hidden, hidden), jnp.float32),
        s * jax.random.normal(keys[13], (hidden,), jnp.float32),
    )

    # tile_e=128 with E=300 -> 3 edge tiles (last one partially padded): exercises the
    # online-softmax accumulation and the padded-edge path.
    out = multi_head_attention(q, k, v, attn_bias, sparse_row, sparse_col, params,
                               head_size, tile_e=128)
    out = jax.block_until_ready(out)

    ref = reference_mha(q, k, v, attn_bias, sparse_row, sparse_col, params, head_size)
    assert out.shape == (N, hidden)
    assert jnp.all(jnp.isfinite(out))
    assert jnp.allclose(out, ref, rtol=2e-2, atol=2e-2), "mismatch vs JAX reference"

    print("KERNEL_OK")
</pallas_src>

<mosaic_0001>
module attributes {stable_mosaic.version = 11 : i64} {
  func.func @_mha_kernel(%arg0: i32, %arg1: memref<128x1xi32, #tpu.memory_space<vmem>>, %arg2: memref<128x1xi32, #tpu.memory_space<vmem>>, %arg3: memref<128x4xf32, #tpu.memory_space<vmem>>, %arg4: memref<16x32xbf16, #tpu.memory_space<vmem>>, %arg5: memref<16x64xbf16, #tpu.memory_space<vmem>>, %arg6: memref<32x4xf32, #tpu.memory_space<vmem>>, %arg7: memref<4x32xf32, #tpu.memory_space<vmem>>, %arg8: memref<16x32xf32, #tpu.memory_space<vmem>>, %arg9: memref<16x4xf32, #tpu.memory_space<vmem>>, %arg10: memref<8x4xf32, #tpu.memory_space<vmem>>) attributes {dimension_semantics = [#tpu.dimension_semantics<arbitrary>], iteration_bounds = array<i64: 3>, scalar_prefetch = 0 : i64, scratch_operands = 1 : i64, tpu.core_type = #tpu.core_type<tc>, window_params = [{transform_indices = @transform_0, window_bounds = array<i64: 128, 1>}, {transform_indices = @transform_1, window_bounds = array<i64: 128, 1>}, {transform_indices = @transform_2, window_bounds = array<i64: 128, 4>}, {pipeline_mode = #tpu.pipeline_mode<synchronous>, transform_indices = @transform_3, window_bounds = array<i64: 16, 32>}, {pipeline_mode = #tpu.pipeline_mode<synchronous>, transform_indices = @transform_4, window_bounds = array<i64: 16, 64>}, {pipeline_mode = #tpu.pipeline_mode<synchronous>, transform_indices = @transform_5, window_bounds = array<i64: 32, 4>}, {pipeline_mode = #tpu.pipeline_mode<synchronous>, transform_indices = @transform_6, window_bounds = array<i64: 4, 32>}, {pipeline_mode = #tpu.pipeline_mode<synchronous>, transform_indices = @transform_7, window_bounds = array<i64: 16, 32>}, {pipeline_mode = #tpu.pipeline_mode<synchronous>, transform_indices = @transform_8, window_bounds = array<i64: 16, 4>}]} {
    %c0_i32 = arith.constant 0 : i32
    %0 = arith.cmpi eq, %arg0, %c0_i32 : i32
    %1 = arith.extui %0 : i1 to i32
    %cst = arith.constant -1.000000e+30 : f32
    %c0_i32_0 = arith.constant 0 : i32
    %2 = arith.cmpi ne, %1, %c0_i32_0 : i32
    scf.if %2 {
      %66 = vector.broadcast %cst : f32 to vector<8x4xf32>
      %c0_37 = arith.constant 0 : index
      %c0_38 = arith.constant 0 : index
      %67 = vector.load %arg10[%c0_37, %c0_38] : memref<8x4xf32, #tpu.memory_space<vmem>>, vector<8x4xf32>
      tpu.vector_store %arg10[%c0_37, %c0_38], %66 {strides = array<i32>} : memref<8x4xf32, #tpu.memory_space<vmem>>, vector<8x4xf32>,
      %cst_39 = arith.constant 0.000000e+00 : f32
      %68 = vector.broadcast %cst_39 : f32 to vector<16x4xf32>
      %c0_40 = arith.constant 0 : index
      %c0_41 = arith.constant 0 : index
      %69 = vector.load %arg9[%c0_40, %c0_41] : memref<16x4xf32, #tpu.memory_space<vmem>>, vector<16x4xf32>
      tpu.vector_store %arg9[%c0_40, %c0_41], %68 {strides = array<i32>} : memref<16x4xf32, #tpu.memory_space<vmem>>, vector<16x4xf32>,
      %cst_42 = arith.constant 0.000000e+00 : f32
      %70 = vector.broadcast %cst_42 : f32 to vector<16x32xf32>
      %c0_43 = arith.constant 0 : index
      %c0_44 = arith.constant 0 : index
      %71 = vector.load %arg8[%c0_43, %c0_44] : memref<16x32xf32, #tpu.memory_space<vmem>>, vector<16x32xf32>
      tpu.vector_store %arg8[%c0_43, %c0_44], %70 {strides = array<i32>} : memref<16x32xf32, #tpu.memory_space<vmem>>, vector<16x32xf32>,
    } else {
    }
    %c0 = arith.constant 0 : index
    %c0_1 = arith.constant 0 : index
    %3 = vector.load %arg1[%c0, %c0_1] : memref<128x1xi32, #tpu.memory_space<vmem>>, vector<128x1xi32>
    %c0_2 = arith.constant 0 : index
    %c0_3 = arith.constant 0 : index
    %4 = vector.load %arg2[%c0_2, %c0_3] : memref<128x1xi32, #tpu.memory_space<vmem>>, vector<128x1xi32>
    %5 = tpu.iota {dimensions = array<i32: 1>} : vector<128x16xi32>
    %6 = vector.broadcast %3 : vector<128x1xi32> to vector<128x16xi32>
    %7 = arith.cmpi eq, %5, %6 : vector<128x16xi32>
    %8 = arith.extui %7 : vector<128x16xi1> to vector<128x16xi32>
    %9 = arith.sitofp %8 : vector<128x16xi32> to vector<128x16xf32>
    %10 = arith.truncf %9 : vector<128x16xf32> to vector<128x16xbf16>
    %11 = vector.broadcast %4 : vector<128x1xi32> to vector<128x16xi32>
    %12 = arith.cmpi eq, %5, %11 : vector<128x16xi32>
    %13 = arith.extui %12 : vector<128x16xi1> to vector<128x16xi32>
    %14 = arith.sitofp %13 : vector<128x16xi32> to vector<128x16xf32>
    %15 = arith.truncf %14 : vector<128x16xf32> to vector<128x16xbf16>
    %c0_4 = arith.constant 0 : index
    %c0_5 = arith.constant 0 : index
    %16 = vector.load %arg4[%c0_4, %c0_5] : memref<16x32xbf16, #tpu.memory_space<vmem>>, vector<16x32xbf16>
    %cst_6 = arith.constant dense<0.000000e+00> : vector<128x32xf32>
    %17 = tpu.matmul %10, %16, %cst_6 {dimension_numbers = #tpu.dot_dimension_numbers<[1], [0], [0], [1], [0, 0, 1, 1], [], []>} : vector<128x16xbf16>, vector<16x32xbf16>, vector<128x32xf32> -> vector<128x32xf32>
    %c0_7 = arith.constant 0 : index
    %c0_8 = arith.constant 0 : index
    %18 = vector.load %arg5[%c0_7, %c0_8] : memref<16x64xbf16, #tpu.memory_space<vmem>>, vector<16x64xbf16>
    %cst_9 = arith.constant dense<0.000000e+00> : vector<128x64xf32>
    %19 = tpu.matmul %15, %18, %cst_9 {dimension_numbers = #tpu.dot_dimension_numbers<[1], [0], [0], [1], [0, 0, 1, 1], [], []>} : vector<128x16xbf16>, vector<16x64xbf16>, vector<128x64xf32> -> vector<128x64xf32>
    %20 = vector.extract_strided_slice %19 {offsets = [0, 0], sizes = [128, 32], strides = [1, 1]} : vector<128x64xf32> to vector<128x32xf32>
    %21 = vector.extract_strided_slice %19 {offsets = [0, 32], sizes = [128, 32], strides = [1, 1]} : vector<128x64xf32> to vector<128x32xf32>
    %22 = arith.mulf %17, %20 : vector<128x32xf32>
    %c0_10 = arith.constant 0 : index
    %c0_11 = arith.constant 0 : index
    %23 = vector.load %arg6[%c0_10, %c0_11] : memref<32x4xf32, #tpu.memory_space<vmem>>, vector<32x4xf32>
    %cst_12 = arith.constant dense<0.000000e+00> : vector<128x4xf32>
    %24 = tpu.matmul %22, %23, %cst_12 {dimension_numbers = #tpu.dot_dimension_numbers<[1], [0], [0], [1], [0, 0, 1, 1], [], []>} : vector<128x32xf32>, vector<32x4xf32>, vector<128x4xf32> -> vector<128x4xf32>
    %c0_13 = arith.constant 0 : index
    %c0_14 = arith.constant 0 : index
    %25 = vector.load %arg3[%c0_13, %c0_14] : memref<128x4xf32, #tpu.memory_space<vmem>>, vector<128x4xf32>
    %26 = arith.addf %24, %25 : vector<128x4xf32>
    %c16_i32 = arith.constant 16 : i32
    %27 = vector.broadcast %c16_i32 : i32 to vector<128x1xi32>
    %28 = arith.cmpi slt, %3, %27 : vector<128x1xi32>
    %cst_15 = arith.constant -1.000000e+30 : f32
    %29 = vector.shape_cast %28 : vector<128x1xi1> to vector<128x1xi1>
    %30 = vector.broadcast %29 : vector<128x1xi1> to vector<128x4xi1>
    %31 = vector.broadcast %cst_15 : f32 to vector<128x4xf32>
    %32 = arith.select %30, %26, %31 : vector<128x4xi1>, vector<128x4xf32>
    %cst_16 = arith.constant dense<0xFF800000> : vector<4xf32>
    %33 = vector.multi_reduction <maximumf>, %32, %cst_16 [0] : vector<128x4xf32> to vector<4xf32>
    %34 = vector.shape_cast %33 : vector<4xf32> to vector<1x4xf32>
    %c0_17 = arith.constant 0 : index
    %c0_18 = arith.constant 0 : index
    %35 = vector.load %arg10[%c0_17, %c0_18] : memref<8x4xf32, #tpu.memory_space<vmem>>, vector<8x4xf32>
    %36 = vector.broadcast %34 : vector<1x4xf32> to vector<8x4xf32>
    %37 = arith.maximumf %35, %36 : vector<8x4xf32>
    %c0_19 = arith.constant 0 : index
    %c0_20 = arith.constant 0 : index
    %38 = vector.load %arg10[%c0_19, %c0_20] : memref<8x4xf32, #tpu.memory_space<vmem>>, vector<8x4xf32>
    tpu.vector_store %arg10[%c0_19, %c0_20], %37 {strides = array<i32>} : memref<8x4xf32, #tpu.memory_space<vmem>>, vector<8x4xf32>,
    %39 = arith.subf %35, %37 : vector<8x4xf32>
    %40 = math.exp %39 : vector<8x4xf32>
    %c0_21 = arith.constant 0 : index
    %c0_22 = arith.constant 0 : index
    %41 = vector.load %arg7[%c0_21, %c0_22] : memref<4x32xf32, #tpu.memory_space<vmem>>, vector<4x32xf32>
    %cst_23 = arith.constant dense<0.000000e+00> : vector<8x32xf32>
    %42 = tpu.matmul %40, %41, %cst_23 {dimension_numbers = #tpu.dot_dimension_numbers<[1], [0], [0], [1], [0, 0, 1, 1], [], []>} : vector<8x4xf32>, vector<4x32xf32>, vector<8x32xf32> -> vector<8x32xf32>
    %43 = vector.extract_strided_slice %37 {offsets = [0, 0], sizes = [1, 4], strides = [1, 1]} : vector<8x4xf32> to vector<1x4xf32>
    %44 = vector.broadcast %43 : vector<1x4xf32> to vector<128x4xf32>
    %45 = arith.subf %32, %44 : vector<128x4xf32>
    %46 = math.exp %45 : vector<128x4xf32>
    %c0_24 = arith.constant 0 : index
    %c0_25 = arith.constant 0 : index
    %47 = vector.load %arg7[%c0_24, %c0_25] : memref<4x32xf32, #tpu.memory_space<vmem>>, vector<4x32xf32>
    %cst_26 = arith.constant dense<0.000000e+00> : vector<128x32xf32>
    %48 = tpu.matmul %46, %47, %cst_26 {dimension_numbers = #tpu.dot_dimension_numbers<[1], [0], [0], [1], [0, 0, 1, 1], [], []>} : vector<128x4xf32>, vector<4x32xf32>, vector<128x32xf32> -> vector<128x32xf32>
    %49 = arith.mulf %48, %21 : vector<128x32xf32>
    %50 = arith.truncf %49 : vector<128x32xf32> to vector<128x32xbf16>
    %cst_27 = arith.constant dense<0.000000e+00> : vector<16x32xf32>
    %51 = tpu.matmul %10, %50, %cst_27 {dimension_numbers = #tpu.dot_dimension_numbers<[0], [0], [1], [1], [0, 1, 1, 1], [], []>} : vector<128x16xbf16>, vector<128x32xbf16>, vector<16x32xf32> -> vector<16x32xf32>
    %52 = arith.truncf %46 : vector<128x4xf32> to vector<128x4xbf16>
    %cst_28 = arith.constant dense<0.000000e+00> : vector<16x4xf32>
    %53 = tpu.matmul %10, %52, %cst_28 {dimension_numbers = #tpu.dot_dimension_numbers<[0], [0], [1], [1], [0, 1, 1, 1], [], []>} : vector<128x16xbf16>, vector<128x4xbf16>, vector<16x4xf32> -> vector<16x4xf32>
    %54 = vector.extract_strided_slice %42 {offsets = [0, 0], sizes = [1, 32], strides = [1, 1]} : vector<8x32xf32> to vector<1x32xf32>
    %c0_29 = arith.constant 0 : index
    %c0_30 = arith.constant 0 : index
    %55 = vector.load %arg8[%c0_29, %c0_30] : memref<16x32xf32, #tpu.memory_space<vmem>>, vector<16x32xf32>
    %56 = vector.broadcast %54 : vector<1x32xf32> to vector<16x32xf32>
    %57 = arith.mulf %56, %55 : vector<16x32xf32>
    %58 = arith.addf %57, %51 : vector<16x32xf32>
    %c0_31 = arith.constant 0 : index
    %c0_32 = arith.constant 0 : index
    %59 = vector.load %arg8[%c0_31, %c0_32] : memref<16x32xf32, #tpu.memory_space<vmem>>, vector<16x32xf32>
    tpu.vector_store %arg8[%c0_31, %c0_32], %58 {strides = array<i32>} : memref<16x32xf32, #tpu.memory_space<vmem>>, vector<16x32xf32>,
    %60 = vector.extract_strided_slice %40 {offsets = [0, 0], sizes = [1, 4], strides = [1, 1]} : vector<8x4xf32> to vector<1x4xf32>
    %c0_33 = arith.constant 0 : index
    %c0_34 = arith.constant 0 : index
    %61 = vector.load %arg9[%c0_33, %c0_34] : memref<16x4xf32, #tpu.memory_space<vmem>>, vector<16x4xf32>
    %62 = vector.broadcast %60 : vector<1x4xf32> to vector<16x4xf32>
    %63 = arith.mulf %62, %61 : vector<16x4xf32>
    %64 = arith.addf %63, %53 : vector<16x4xf32>
    %c0_35 = arith.constant 0 : index
    %c0_36 = arith.constant 0 : index
    %65 = vector.load %arg9[%c0_35, %c0_36] : memref<16x4xf32, #tpu.memory_space<vmem>>, vector<16x4xf32>
    tpu.vector_store %arg9[%c0_35, %c0_36], %64 {strides = array<i32>} : memref<16x4xf32, #tpu.memory_space<vmem>>, vector<16x4xf32>,
    return
  }
  func.func @transform_0(%arg0: i32) -> (i32, i32) {
    %c0_i32 = arith.constant 0 : i32
    %c0_i32_0 = arith.constant 0 : i32
    return %arg0, %c0_i32 : i32, i32
  }
  func.func @transform_1(%arg0: i32) -> (i32, i32) {
    %c0_i32 = arith.constant 0 : i32
    %c0_i32_0 = arith.constant 0 : i32
    return %arg0, %c0_i32 : i32, i32
  }
  func.func @transform_2(%arg0: i32) -> (i32, i32) {
    %c0_i32 = arith.constant 0 : i32
    %c0_i32_0 = arith.constant 0 : i32
    return %arg0, %c0_i32 : i32, i32
  }
  func.func @transform_3(%arg0: i32) -> (i32, i32) {
    %c0_i32 = arith.constant 0 : i32
    %c0_i32_0 = arith.constant 0 : i32
    %c0_i32_1 = arith.constant 0 : i32
    return %c0_i32, %c0_i32_0 : i32, i32
  }
  func.func @transform_4(%arg0: i32) -> (i32, i32) {
    %c0_i32 = arith.constant 0 : i32
    %c0_i32_0 = arith.constant 0 : i32
    %c0_i32_1 = arith.constant 0 : i32
    return %c0_i32, %c0_i32_0 : i32, i32
  }
  func.func @transform_5(%arg0: i32) -> (i32, i32) {
    %c0_i32 = arith.constant 0 : i32
    %c0_i32_0 = arith.constant 0 : i32
    %c0_i32_1 = arith.constant 0 : i32
    return %c0_i32, %c0_i32_0 : i32, i32
  }
  func.func @transform_6(%arg0: i32) -> (i32, i32) {
    %c0_i32 = arith.constant 0 : i32
    %c0_i32_0 = arith.constant 0 : i32
    %c0_i32_1 = arith.constant 0 : i32
    return %c0_i32, %c0_i32_0 : i32, i32
  }
  func.func @transform_7(%arg0: i32) -> (i32, i32) {
    %c0_i32 = arith.constant 0 : i32
    %c0_i32_0 = arith.constant 0 : i32
    %c0_i32_1 = arith.constant 0 : i32
    return %c0_i32, %c0_i32_0 : i32, i32
  }
  func.func @transform_8(%arg0: i32) -> (i32, i32) {
    %c0_i32 = arith.constant 0 : i32
    %c0_i32_0 = arith.constant 0 : i32
    %c0_i32_1 = arith.constant 0 : i32
    return %c0_i32, %c0_i32_0 : i32, i32
  }
}

</mosaic_0001>

<llo_original>
// kernel: tpu_custom_call.1
$region0: #{tpu_custom_call.1}
  #allocation0 [shape = 'u32[]', space=smem, size = 0x4, offset = 0x4, fixed_abs, tag = 'smem constant byte address 0x4 - core index']
  #allocation1 [shape = 'u32[144,128]{1,0:T(1,128)}', space=vmem, size = 0x12000, scoped, tag = 'internal scratch']
  #allocation2 [shape = 'f32[8,4]{1,0:T(8,128)}', space=vmem, size = 0x1000, scoped, tag = 'scratch operand']
  %s0 = inlined_call_operand.vmem [shape: s32[384,1], index: 0, kind: input, shape index: {}]
  %s1 = inlined_call_operand.vmem [shape: s32[384,1], index: 1, kind: input, shape index: {}]
  %s2 = inlined_call_operand.vmem [shape: f32[384,4], index: 2, kind: input, shape index: {}]
  %s3 = inlined_call_operand.vmem [shape: bf16[16,32], index: 3, kind: input, shape index: {}]
  %s4 = inlined_call_operand.vmem [shape: bf16[16,64], index: 4, kind: input, shape index: {}]
  %s5 = inlined_call_operand.vmem [shape: f32[32,4], index: 5, kind: input, shape index: {}]
  %s6 = inlined_call_operand.vmem [shape: f32[4,32], index: 6, kind: input, shape index: {}]
  %s7 = inlined_call_operand.hbm [shape: f32[16,32], index: 7, kind: output, shape index: {0}]
  %s8 = inlined_call_operand.vmem [shape: f32[16,4], index: 8, kind: output, shape index: {1}]
  %9 = xla_tuple %s7, %s8
  %s10 = sld [smem:[#allocation0]]
  $region73: #{tpu_custom_call.1} parent=0
    _
  %s12 = ssub.s32 1, %s10
  %s13 = scalar_select 0, %s12, %s10
  $region1: #{tpu_custom_call.1} parent=0
    #allocation3 [shape = 'u8[8192]{0}', space=vmem, size = 0x2000, scoped, tag = 'output window, operand 0, single buffered']
    #allocation4 [shape = 's32[2]{0}', space=sflag, size = 0x8, scoped, tag = 'scoped memory for tpu_custom_call.1']
    %14 = vsyncpa [#allocation4], 0
    loop: start=0, step=1, limit=5
    $region2: #{tpu_custom_call.1} parent=1 // loop_pre_header
      _
    $region3: #{tpu_custom_call.1} parent=1 // loop_header
      %s16 = sphi 0, %s20
      %p17 = scmp.ge.s32.totalorder %s16, 5
      %s26 = sphi 0, %s28
      %s29 = sphi 0, %s26
      %s30 = sphi 0, %s29
      %s46 = sphi 0, %s30
      %s52 = sphi 0, %s54
      %s55 = sphi 0, %s52
      %s56 = sphi 0, %s55
      %s72 = sphi 0, %s56
      %s78 = sphi 0, %s80
      %s81 = sphi 0, %s78
      %s82 = sphi 0, %s81
      %s98 = sphi 0, %s82
      %s102 = sphi 0, %s102
      %s104 = sphi 0, %s102
      %s105 = sphi 0, %s104
      %s119 = sphi 0, %s105
      %s123 = sphi 0, %s123
      %s125 = sphi 0, %s123
      %s126 = sphi 0, %s125
      %s140 = sphi 0, %s126
      %s144 = sphi 0, %s144
      %s146 = sphi 0, %s144
      %s147 = sphi 0, %s146
      %s161 = sphi 0, %s147
      %s165 = sphi 0, %s165
      %s167 = sphi 0, %s165
      %s168 = sphi 0, %s167
      %s182 = sphi 0, %s168
      %s186 = sphi 0, %s186
      %s188 = sphi 0, %s186
      %s189 = sphi 0, %s188
      %s203 = sphi 0, %s189
      %s207 = sphi 0, %s207
      %s209 = sphi 0, %s207
      %s210 = sphi 0, %s209
      %s224 = sphi 0, %s210
    $region4: #{tpu_custom_call.1} parent=1 // loop_header_branch
      %19 = sbr.rel (%p17) target = $region8
    $region5: #{tpu_custom_call.1} parent=1 // loop_body
      %s21 = ssub.s32 %s16, 1
      %s22 = ssub.s32 %s16, 2
      %s23 = sadd.s32 %s16, 1
      %s24 = ssub.s32 %s16, %s23
      %p25 = scmp.eq.s32.totalorder %s24, 0
      %s27 = sadd.s32 %s26, 1
      %s28 = scalar_select %p25, %s26, %s27
      %p31 = pneg %p25
      %p32 = scmp.eq.s32.totalorder %s16, 2
      %p33 = por %p31, %p32
      %p34 = scmp.ne.s32.totalorder %s26, %s29
      %p35 = scmp.eq.s32.totalorder %s16, 0
      %p36 = por %p34, %p35
      %p37 = scmp.ne.s32.totalorder %s26, %s29
      %p38 = scmp.eq.s32.totalorder %s21, 2
      %p39 = por %p37, %p38
      %p40 = scmp.ne.s32.totalorder %s29, %s30
      %p41 = scmp.eq.s32.totalorder %s21, 0
      %p42 = por %p40, %p41
      %p43 = scmp.ne.s32.totalorder %s29, %s30
      %p44 = scmp.eq.s32.totalorder %s22, 2
      %p45 = por %p43, %p44
      %p47 = scmp.ne.s32.totalorder %s30, %s46
      %p48 = scmp.eq.s32.totalorder %s22, 0
      %p49 = por %p47, %p48
      %s50 = ssub.s32 %s16, %s23
      %p51 = scmp.eq.s32.totalorder %s50, 0
      %s53 = sadd.s32 %s52, 1
      %s54 = scalar_select %p51, %s52, %s53
      %p57 = pneg %p51
      %p58 = scmp.eq.s32.totalorder %s16, 2
      %p59 = por %p57, %p58
      %p60 = scmp.ne.s32.totalorder %s52, %s55
      %p61 = scmp.eq.s32.totalorder %s16, 0
      %p62 = por %p60, %p61
      %p63 = scmp.ne.s32.totalorder %s52, %s55
      %p64 = scmp.eq.s32.totalorder %s21, 2
      %p65 = por %p63, %p64
      %p66 = scmp.ne.s32.totalorder %s55, %s56
      %p67 = scmp.eq.s32.totalorder %s21, 0
      %p68 = por %p66, %p67
      %p69 = scmp.ne.s32.totalorder %s55, %s56
      %p70 = scmp.eq.s32.totalorder %s22, 2
      %p71 = por %p69, %p70
      %p73 = scmp.ne.s32.totalorder %s56, %s72
      %p74 = scmp.eq.s32.totalorder %s22, 0
      %p75 = por %p73, %p74
      %s76 = ssub.s32 %s16, %s23
      %p77 = scmp.eq.s32.totalorder %s76, 0
      %s79 = sadd.s32 %s78, 1
      %s80 = scalar_select %p77, %s78, %s79
      %p83 = pneg %p77
      %p84 = scmp.eq.s32.totalorder %s16, 2
      %p85 = por %p83, %p84
      %p86 = scmp.ne.s32.totalorder %s78, %s81
      %p87 = scmp.eq.s32.totalorder %s16, 0
      %p88 = por %p86, %p87
      %p89 = scmp.ne.s32.totalorder %s78, %s81
      %p90 = scmp.eq.s32.totalorder %s21, 2
      %p91 = por %p89, %p90
      %p92 = scmp.ne.s32.totalorder %s81, %s82
      %p93 = scmp.eq.s32.totalorder %s21, 0
      %p94 = por %p92, %p93
      %p95 = scmp.ne.s32.totalorder %s81, %s82
      %p96 = scmp.eq.s32.totalorder %s22, 2
      %p97 = por %p95, %p96
      %p99 = scmp.ne.s32.totalorder %s82, %s98
      %p100 = scmp.eq.s32.totalorder %s22, 0
      %p101 = por %p99, %p100
      %s103 = sadd.s32 %s102, 1
      %p106 = scmp.eq.s32.totalorder %s16, 2
      %p107 = scmp.ne.s32.totalorder %s102, %s104
      %p108 = scmp.eq.s32.totalorder %s16, 0
      %p109 = por %p107, %p108
      %p110 = scmp.ne.s32.totalorder %s102, %s104
      %p111 = scmp.eq.s32.totalorder %s21, 2
      %p112 = por %p110, %p111
      %p113 = scmp.ne.s32.totalorder %s104, %s105
      %p114 = scmp.eq.s32.totalorder %s21, 0
      %p115 = por %p113, %p114
      %p116 = scmp.ne.s32.totalorder %s104, %s105
      %p117 = scmp.eq.s32.totalorder %s22, 2
      %p118 = por %p116, %p117
      %p120 = scmp.ne.s32.totalorder %s105, %s119
      %p121 = scmp.eq.s32.totalorder %s22, 0
      %p122 = por %p120, %p121
      %s124 = sadd.s32 %s123, 1
      %p127 = scmp.eq.s32.totalorder %s16, 2
      %p128 = scmp.ne.s32.totalorder %s123, %s125
      %p129 = scmp.eq.s32.totalorder %s16, 0
      %p130 = por %p128, %p129
      %p131 = scmp.ne.s32.totalorder %s123, %s125
      %p132 = scmp.eq.s32.totalorder %s21, 2
      %p133 = por %p131, %p132
      %p134 = scmp.ne.s32.totalorder %s125, %s126
      %p135 = scmp.eq.s32.totalorder %s21, 0
      %p136 = por %p134, %p135
      %p137 = scmp.ne.s32.totalorder %s125, %s126
      %p138 = scmp.eq.s32.totalorder %s22, 2
      %p139 = por %p137, %p138
      %p141 = scmp.ne.s32.totalorder %s126, %s140
      %p142 = scmp.eq.s32.totalorder %s22, 0
      %p143 = por %p141, %p142
      %s145 = sadd.s32 %s144, 1
      %p148 = scmp.eq.s32.totalorder %s16, 2
      %p149 = scmp.ne.s32.totalorder %s144, %s146
      %p150 = scmp.eq.s32.totalorder %s16, 0
      %p151 = por %p149, %p150
      %p152 = scmp.ne.s32.totalorder %s144, %s146
      %p153 = scmp.eq.s32.totalorder %s21, 2
      %p154 = por %p152, %p153
      %p155 = scmp.ne.s32.totalorder %s146, %s147
      %p156 = scmp.eq.s32.totalorder %s21, 0
      %p157 = por %p155, %p156
      %p158 = scmp.ne.s32.totalorder %s146, %s147
      %p159 = scmp.eq.s32.totalorder %s22, 2
      %p160 = por %p158, %p159
      %p162 = scmp.ne.s32.totalorder %s147, %s161
      %p163 = scmp.eq.s32.totalorder %s22, 0
      %p164 = por %p162, %p163
      %s166 = sadd.s32 %s165, 1
      %p169 = scmp.eq.s32.totalorder %s16, 2
      %p170 = scmp.ne.s32.totalorder %s165, %s167
      %p171 = scmp.eq.s32.totalorder %s16, 0
      %p172 = por %p170, %p171
      %p173 = scmp.ne.s32.totalorder %s165, %s167
      %p174 = scmp.eq.s32.totalorder %s21, 2
      %p175 = por %p173, %p174
      %p176 = scmp.ne.s32.totalorder %s167, %s168
      %p177 = scmp.eq.s32.totalorder %s21, 0
      %p178 = por %p176, %p177
      %p179 = scmp.ne.s32.totalorder %s167, %s168
      %p180 = scmp.eq.s32.totalorder %s22, 2
      %p181 = por %p179, %p180
      %p183 = scmp.ne.s32.totalorder %s168, %s182
      %p184 = scmp.eq.s32.totalorder %s22, 0
      %p185 = por %p183, %p184
      %s187 = sadd.s32 %s186, 1
      %p190 = scmp.eq.s32.totalorder %s16, 2
      %p191 = scmp.ne.s32.totalorder %s186, %s188
      %p192 = scmp.eq.s32.totalorder %s16, 0
      %p193 = por %p191, %p192
      %p194 = scmp.ne.s32.totalorder %s186, %s188
      %p195 = scmp.eq.s32.totalorder %s21, 2
      %p196 = por %p194, %p195
      %p197 = scmp.ne.s32.totalorder %s188, %s189
      %p198 = scmp.eq.s32.totalorder %s21, 0
      %p199 = por %p197, %p198
      %p200 = scmp.ne.s32.totalorder %s188, %s189
      %p201 = scmp.eq.s32.totalorder %s22, 2
      %p202 = por %p200, %p201
      %p204 = scmp.ne.s32.totalorder %s189, %s203
      %p205 = scmp.eq.s32.totalorder %s22, 0
      %p206 = por %p204, %p205
      %s208 = sadd.s32 %s207, 1
      %p211 = scmp.eq.s32.totalorder %s16, 2
      %p212 = scmp.ne.s32.totalorder %s207, %s209
      %p213 = scmp.eq.s32.totalorder %s16, 0
      %p214 = por %p212, %p213
      %p215 = scmp.ne.s32.totalorder %s207, %s209
      %p216 = scmp.eq.s32.totalorder %s21, 2
      %p217 = por %p215, %p216
      %p218 = scmp.ne.s32.totalorder %s209, %s210
      %p219 = scmp.eq.s32.totalorder %s21, 0
      %p220 = por %p218, %p219
      %p221 = scmp.ne.s32.totalorder %s209, %s210
      %p222 = scmp.eq.s32.totalorder %s22, 2
      %p223 = por %p221, %p222
      %p225 = scmp.ne.s32.totalorder %s210, %s224
      %p226 = scmp.eq.s32.totalorder %s22, 0
      %p227 = por %p225, %p226
      %p228 = scmp.le.s32.totalorder 1, %s16
      %p229 = scmp.lt.s32.totalorder %s16, 4
      %p230 = pnand %p228, %p229
      %p231 = pneg %p230
      // Predicated region
      $region9: #{tpu_custom_call.1} parent=5 // pred_check
        _
      $region10: #{tpu_custom_call.1} parent=5 // pred_check_branch
        %233 = sbr.rel (%p230) target = $region12
      $region11: #{tpu_custom_call.1} parent=5 // pred_region
        %s234 = ssub.s32 %s16, 1
        // Predicated region
        $region13: #{tpu_custom_call.1} parent=11 // pred_check
          %p235 = pneg %p115
        $region14: #{tpu_custom_call.1} parent=11 // pred_check_branch
          %237 = sbr.rel (%p235) target = $region16
        $region15: #{tpu_custom_call.1} parent=11 // pred_region
          _
        $region16: #{tpu_custom_call.1} parent=11 // pred_fallthru
          _
        // Predicated region
        $region17: #{tpu_custom_call.1} parent=11 // pred_check
          %p238 = pneg %p136
        $region18: #{tpu_custom_call.1} parent=11 // pred_check_branch
          %240 = sbr.rel (%p238) target = $region20
        $region19: #{tpu_custom_call.1} parent=11 // pred_region
          _
        $region20: #{tpu_custom_call.1} parent=11 // pred_fallthru
          _
        // Predicated region
        $region21: #{tpu_custom_call.1} parent=11 // pred_check
          %p241 = pneg %p157
        $region22: #{tpu_custom_call.1} parent=11 // pred_check_branch
          %243 = sbr.rel (%p241) target = $region24
        $region23: #{tpu_custom_call.1} parent=11 // pred_region
          _
        $region24: #{tpu_custom_call.1} parent=11 // pred_fallthru
          _
        // Predicated region
        $region25: #{tpu_custom_call.1} parent=11 // pred_check
          %p244 = pneg %p178
        $region26: #{tpu_custom_call.1} parent=11 // pred_check_branch
          %246 = sbr.rel (%p244) target = $region28
        $region27: #{tpu_custom_call.1} parent=11 // pred_region
          _
        $region28: #{tpu_custom_call.1} parent=11 // pred_fallthru
          _
      $region12: #{tpu_custom_call.1} parent=5 // pred_fallthru
        _
      %p247 = scmp.lt.s32.totalorder %s16, 3
      // Predicated region
      $region29: #{tpu_custom_call.1} parent=5 // pred_check
        %p248 = pneg %p247
      $region30: #{tpu_custom_call.1} parent=5 // pred_check_branch
        %250 = sbr.rel (%p248) target = $region32
      $region31: #{tpu_custom_call.1} parent=5 // pred_region
        // Predicated region
        $region33: #{tpu_custom_call.1} parent=31 // pred_check
          %p251 = pneg %p36
        $region34: #{tpu_custom_call.1} parent=31 // pred_check_branch
          %253 = sbr.rel (%p251) target = $region36
        $region35: #{tpu_custom_call.1} parent=31 // pred_region
          %s254 = smul.u32 16, %s16
          %p255 = scmp.lt.s32.totalorder %s254, 47
          %s256 = scalar_select %p255, %s254, 47
          %s257 = smul.addr %s256, 8
          %s258 = scalar_lea.vmem %s0, %s257
          %s259 = smul.u32 16, %s16
        $region36: #{tpu_custom_call.1} parent=31 // pred_fallthru
          _
        // Predicated region
        $region37: #{tpu_custom_call.1} parent=31 // pred_check
          %p260 = pneg %p62
        $region38: #{tpu_custom_call.1} parent=31 // pred_check_branch
          %262 = sbr.rel (%p260) target = $region40
        $region39: #{tpu_custom_call.1} parent=31 // pred_region
          %s263 = smul.u32 16, %s16
          %p264 = scmp.lt.s32.totalorder %s263, 47
          %s265 = scalar_select %p264, %s263, 47
          %s266 = smul.addr %s265, 8
          %s267 = scalar_lea.vmem %s1, %s266
          %s268 = smul.u32 16, %s16
        $region40: #{tpu_custom_call.1} parent=31 // pred_fallthru
          _
        // Predicated region
        $region41: #{tpu_custom_call.1} parent=31 // pred_check
          %p269 = pneg %p88
        $region42: #{tpu_custom_call.1} parent=31 // pred_check_branch
          %271 = sbr.rel (%p269) target = $region44
        $region43: #{tpu_custom_call.1} parent=31 // pred_region
          %s272 = smul.u32 16, %s16
          %p273 = scmp.lt.s32.totalorder %s272, 47
          %s274 = scalar_select %p273, %s272, 47
          %s275 = smul.addr %s274, 8
          %s276 = scalar_lea.vmem %s2, %s275
          %s277 = smul.u32 16, %s16
        $region44: #{tpu_custom_call.1} parent=31 // pred_fallthru
          _
      $region32: #{tpu_custom_call.1} parent=5 // pred_fallthru
        _
      %p278 = scmp.le.s32.totalorder 1, %s16
      %p279 = scmp.lt.s32.totalorder %s16, 4
      %p280 = pnand %p278, %p279
      %p281 = pneg %p280
      // Predicated region
      $region45: #{tpu_custom_call.1} parent=5 // pred_check
        _
      $region46: #{tpu_custom_call.1} parent=5 // pred_check_branch
        %283 = sbr.rel (%p280) target = $region48
      $region47: #{tpu_custom_call.1} parent=5 // pred_region
        %s284 = ssub.s32 %s16, 1
        %s285 = smul.u32 16, %s21
        %p286 = scmp.lt.s32.totalorder %s285, 47
        %s287 = scalar_select %p286, %s285, 47
        %s288 = smul.addr %s287, 8
        %s289 = scalar_lea.vmem %s0, %s288
        %p290 = pneg %p42
        %p291 = pneg %p39
        %s292 = smul.u32 16, %s21
        %p293 = scmp.lt.s32.totalorder %s292, 47
        %s294 = scalar_select %p293, %s292, 47
        %s295 = smul.addr %s294, 8
        %s296 = scalar_lea.vmem %s1, %s295
        %p297 = pneg %p68
        %p298 = pneg %p65
        %s299 = smul.u32 16, %s21
        %p300 = scmp.lt.s32.totalorder %s299, 47
        %s301 = scalar_select %p300, %s299, 47
        %s302 = smul.addr %s301, 8
        %s303 = scalar_lea.vmem %s2, %s302
        %p304 = pneg %p94
        %p305 = pneg %p91
        %p306 = pneg %p115
        %p307 = pneg %p112
        %p308 = pneg %p136
        %p309 = pneg %p133
        %p310 = pneg %p157
        %p311 = pneg %p154
        %p312 = pneg %p178
        %p313 = pneg %p175
        %p314 = pneg %p199
        %p315 = pneg %p196
        %p316 = pneg %p220
        %p317 = pneg %p217
        %s318 = smul.u32 16, %s21
        %p319 = scmp.lt.s32.totalorder %s318, 47
        %s320 = scalar_select %p319, %s318, 47
        %s321 = smul.addr %s320, 8
        %s322 = scalar_lea.vmem %s0, %s321
        %s323 = smul.u32 16, %s21
        %s324 = smul.u32 16, %s21
        %p325 = scmp.lt.s32.totalorder %s324, 47
        %s326 = scalar_select %p325, %s324, 47
        %s327 = smul.addr %s326, 8
        %s328 = scalar_lea.vmem %s1, %s327
        %s329 = smul.u32 16, %s21
        %s330 = smul.u32 16, %s21
        %p331 = scmp.lt.s32.totalorder %s330, 47
        %s332 = scalar_select %p331, %s330, 47
        %s333 = smul.addr %s332, 8
        %s334 = scalar_lea.vmem %s2, %s333
        %s335 = smul.u32 16, %s21
        %p337 = scmp.eq.s32.totalorder %s21, 0
        // Predicated region
        $region49: #{tpu_custom_call.1} parent=47 // pred_check
          %p338 = pneg %p337
        $region50: #{tpu_custom_call.1} parent=47 // pred_check_branch
          %340 = sbr.rel (%p338) target = $region52
        $region51: #{tpu_custom_call.1} parent=47 // pred_region
          %vm341 = vcmask 31744
          %342 = vst.msk [vmem:[#allocation2] sm:$0xff] %vm341, -1e+30
          %343 = vst.msk [vmem:[%s8] sm:$0xff] %vm341, 0.0
          %344 = vst.msk [vmem:[%s8 + $0x8] sm:$0xff] %vm341, 0.0
          %vm345 = vcmask 261120
          %346 = vst.msk [vmem:[#allocation3] sm:$0xff] %vm345, 0.0
          %347 = vst.msk [vmem:[#allocation3 + $0x8] sm:$0xff] %vm345, 0.0
        $region52: #{tpu_custom_call.1} parent=47 // pred_fallthru
          _
        %v348 = vld [vmem:[%s322] sm:$0xff]
        %v349 = vld [vmem:[%s322 + $0x8] sm:$0xff]
        %v350 = vld [vmem:[%s322 + $0x10] sm:$0xff]
        %v351 = vld [vmem:[%s322 + $0x18] sm:$0xff]
        %v352 = vld [vmem:[%s322 + $0x20] sm:$0xff]
        %v353 = vld [vmem:[%s322 + $0x28] sm:$0xff]
        %v354 = vld [vmem:[%s322 + $0x30] sm:$0xff]
        %v355 = vld [vmem:[%s322 + $0x38] sm:$0xff]
        %v356 = vld [vmem:[%s322 + $0x40] sm:$0xff]
        %v357 = vld [vmem:[%s322 + $0x48] sm:$0xff]
        %v358 = vld [vmem:[%s322 + $0x50] sm:$0xff]
        %v359 = vld [vmem:[%s322 + $0x58] sm:$0xff]
        %v360 = vld [vmem:[%s322 + $0x60] sm:$0xff]
        %v361 = vld [vmem:[%s322 + $0x68] sm:$0xff]
        %v362 = vld [vmem:[%s322 + $0x70] sm:$0xff]
        %v363 = vld [vmem:[%s322 + $0x78] sm:$0xff]
        %v364 = vld [vmem:[%s328] sm:$0xff]
        %v365 = vld [vmem:[%s328 + $0x8] sm:$0xff]
        %v366 = vld [vmem:[%s328 + $0x10] sm:$0xff]
        %v367 = vld [vmem:[%s328 + $0x18] sm:$0xff]
        %v368 = vld [vmem:[%s328 + $0x20] sm:$0xff]
        %v369 = vld [vmem:[%s328 + $0x28] sm:$0xff]
        %v370 = vld [vmem:[%s328 + $0x30] sm:$0xff]
        %v371 = vld [vmem:[%s328 + $0x38] sm:$0xff]
        %v372 = vld [vmem:[%s328 + $0x40] sm:$0xff]
        %v373 = vld [vmem:[%s328 + $0x48] sm:$0xff]
        %v374 = vld [vmem:[%s328 + $0x50] sm:$0xff]
        %v375 = vld [vmem:[%s328 + $0x58] sm:$0xff]
        %v376 = vld [vmem:[%s328 + $0x60] sm:$0xff]
        %v377 = vld [vmem:[%s328 + $0x68] sm:$0xff]
        %v378 = vld [vmem:[%s328 + $0x70] sm:$0xff]
        %v379 = vld [vmem:[%s328 + $0x78] sm:$0xff]
        %v380 = vlaneseq
        %v381 = vand.u32 %v380, 127
        %382 = vset.pattern.permute.xlu0 0
        %383 = vperm.xlu0 %382, %v348
        %v384 = vpop.permute.xlu0 %383
        %385 = vset.pattern.permute.xlu0 0
        %386 = vperm.xlu0 %385, %v349
        %v387 = vpop.permute.xlu0 %386
        %388 = vset.pattern.permute.xlu0 0
        %389 = vperm.xlu0 %388, %v350
        %v390 = vpop.permute.xlu0 %389
        %391 = vset.pattern.permute.xlu0 0
        %392 = vperm.xlu0 %391, %v351
        %v393 = vpop.permute.xlu0 %392
        %394 = vset.pattern.permute.xlu0 0
        %395 = vperm.xlu0 %394, %v352
        %v396 = vpop.permute.xlu0 %395
        %397 = vset.pattern.permute.xlu0 0
        %398 = vperm.xlu0 %397, %v353
        %v399 = vpop.permute.xlu0 %398
        %400 = vset.pattern.permute.xlu0 0
        %401 = vperm.xlu0 %400, %v354
        %v402 = vpop.permute.xlu0 %401
        %403 = vset.pattern.permute.xlu0 0
        %404 = vperm.xlu0 %403, %v355
        %v405 = vpop.permute.xlu0 %404
        %406 = vset.pattern.permute.xlu0 0
        %407 = vperm.xlu0 %406, %v356
        %v408 = vpop.permute.xlu0 %407
        %409 = vset.pattern.permute.xlu0 0
        %410 = vperm.xlu0 %409, %v357
        %v411 = vpop.permute.xlu0 %410
        %412 = vset.pattern.permute.xlu0 0
        %413 = vperm.xlu0 %412, %v358
        %v414 = vpop.permute.xlu0 %413
        %415 = vset.pattern.permute.xlu0 0
        %416 = vperm.xlu0 %415, %v359
        %v417 = vpop.permute.xlu0 %416
        %418 = vset.pattern.permute.xlu0 0
        %419 = vperm.xlu0 %418, %v360
        %v420 = vpop.permute.xlu0 %419
        %421 = vset.pattern.permute.xlu0 0
        %422 = vperm.xlu0 %421, %v361
        %v423 = vpop.permute.xlu0 %422
        %424 = vset.pattern.permute.xlu0 0
        %425 = vperm.xlu0 %424, %v362
        %v426 = vpop.permute.xlu0 %425
        %427 = vset.pattern.permute.xlu0 0
        %428 = vperm.xlu0 %427, %v363
        %v429 = vpop.permute.xlu0 %428
        %vm430 = vcmp.eq.s32.totalorder %v381, %v384
        %vm431 = vcmp.eq.s32.totalorder %v381, %v387
        %vm432 = vcmp.eq.s32.totalorder %v381, %v390
        %vm433 = vcmp.eq.s32.totalorder %v381, %v393
        %vm434 = vcmp.eq.s32.totalorder %v381, %v396
        %vm435 = vcmp.eq.s32.totalorder %v381, %v399
        %vm436 = vcmp.eq.s32.totalorder %v381, %v402
        %vm437 = vcmp.eq.s32.totalorder %v381, %v405
        %vm438 = vcmp.eq.s32.totalorder %v381, %v408
        %vm439 = vcmp.eq.s32.totalorder %v381, %v411
        %vm440 = vcmp.eq.s32.totalorder %v381, %v414
        %vm441 = vcmp.eq.s32.totalorder %v381, %v417
        %vm442 = vcmp.eq.s32.totalorder %v381, %v420
        %vm443 = vcmp.eq.s32.totalorder %v381, %v423
        %vm444 = vcmp.eq.s32.totalorder %v381, %v426
        %vm445 = vcmp.eq.s32.totalorder %v381, %v429
        %v446 = vsel %vm430, 1, 0
        %v447 = vsel %vm431, 1, 0
        %v448 = vsel %vm432, 1, 0
        %v449 = vsel %vm433, 1, 0
        %v450 = vsel %vm434, 1, 0
        %v451 = vsel %vm435, 1, 0
        %v452 = vsel %vm436, 1, 0
        %v453 = vsel %vm437, 1, 0
        %v454 = vsel %vm438, 1, 0
        %v455 = vsel %vm439, 1, 0
        %v456 = vsel %vm440, 1, 0
        %v457 = vsel %vm441, 1, 0
        %v458 = vsel %vm442, 1, 0
        %v459 = vsel %vm443, 1, 0
        %v460 = vsel %vm444, 1, 0
        %v461 = vsel %vm445, 1, 0
        %v462 = vcvt.s32.f32 %v446
        %v463 = vcvt.s32.f32 %v447
        %v464 = vcvt.s32.f32 %v448
        %v465 = vcvt.s32.f32 %v449
        %v466 = vcvt.s32.f32 %v450
        %v467 = vcvt.s32.f32 %v451
        %v468 = vcvt.s32.f32 %v452
        %v469 = vcvt.s32.f32 %v453
        %v470 = vcvt.s32.f32 %v454
        %v471 = vcvt.s32.f32 %v455
        %v472 = vcvt.s32.f32 %v456
        %v473 = vcvt.s32.f32 %v457
        %v474 = vcvt.s32.f32 %v458
        %v475 = vcvt.s32.f32 %v459
        %v476 = vcvt.s32.f32 %v460
        %v477 = vcvt.s32.f32 %v461
        %v478 = vpack.c.bf16 %v463, %v462
        %v479 = vpack.c.bf16 %v465, %v464
        %v480 = vpack.c.bf16 %v467, %v466
        %v481 = vpack.c.bf16 %v469, %v468
        %v482 = vpack.c.bf16 %v471, %v470
        %v483 = vpack.c.bf16 %v473, %v472
        %v484 = vpack.c.bf16 %v475, %v474
        %v485 = vpack.c.bf16 %v477, %v476
        %486 = vset.pattern.permute.xlu0 0
        %487 = vperm.xlu0 %486, %v364
        %v488 = vpop.permute.xlu0 %487
        %489 = vset.pattern.permute.xlu0 0
        %490 = vperm.xlu0 %489, %v365
        %v491 = vpop.permute.xlu0 %490
        %492 = vset.pattern.permute.xlu0 0
        %493 = vperm.xlu0 %492, %v366
        %v494 = vpop.permute.xlu0 %493
        %495 = vset.pattern.permute.xlu0 0
        %496 = vperm.xlu0 %495, %v367
        %v497 = vpop.permute.xlu0 %496
        %498 = vset.pattern.permute.xlu0 0
        %499 = vperm.xlu0 %498, %v368
        %v500 = vpop.permute.xlu0 %499
        %501 = vset.pattern.permute.xlu0 0
        %502 = vperm.xlu0 %501, %v369
        %v503 = vpop.permute.xlu0 %502
        %504 = vset.pattern.permute.xlu0 0
        %505 = vperm.xlu0 %504, %v370
        %v506 = vpop.permute.xlu0 %505
        %507 = vset.pattern.permute.xlu0 0
        %508 = vperm.xlu0 %507, %v371
        %v509 = vpop.permute.xlu0 %508
        %510 = vset.pattern.permute.xlu0 0
        %511 = vperm.xlu0 %510, %v372
        %v512 = vpop.permute.xlu0 %511
        %513 = vset.pattern.permute.xlu0 0
        %514 = vperm.xlu0 %513, %v373
        %v515 = vpop.permute.xlu0 %514
        %516 = vset.pattern.permute.xlu0 0
        %517 = vperm.xlu0 %516, %v374
        %v518 = vpop.permute.xlu0 %517
        %519 = vset.pattern.permute.xlu0 0
        %520 = vperm.xlu0 %519, %v375
        %v521 = vpop.permute.xlu0 %520
        %522 = vset.pattern.permute.xlu0 0
        %523 = vperm.xlu0 %522, %v376
        %v524 = vpop.permute.xlu0 %523
        %525 = vset.pattern.permute.xlu0 0
        %526 = vperm.xlu0 %525, %v377
        %v527 = vpop.permute.xlu0 %526
        %528 = vset.pattern.permute.xlu0 0
        %529 = vperm.xlu0 %528, %v378
        %v530 = vpop.permute.xlu0 %529
        %531 = vset.pattern.permute.xlu0 0
        %532 = vperm.xlu0 %531, %v379
        %v533 = vpop.permute.xlu0 %532
        %vm534 = vcmp.eq.s32.totalorder %v381, %v488
        %vm535 = vcmp.eq.s32.totalorder %v381, %v491
        %vm536 = vcmp.eq.s32.totalorder %v381, %v494
        %vm537 = vcmp.eq.s32.totalorder %v381, %v497
        %vm538 = vcmp.eq.s32.totalorder %v381, %v500
        %vm539 = vcmp.eq.s32.totalorder %v381, %v503
        %vm540 = vcmp.eq.s32.totalorder %v381, %v506
        %vm541 = vcmp.eq.s32.totalorder %v381, %v509
        %vm542 = vcmp.eq.s32.totalorder %v381, %v512
        %vm543 = vcmp.eq.s32.totalorder %v381, %v515
        %vm544 = vcmp.eq.s32.totalorder %v381, %v518
        %vm545 = vcmp.eq.s32.totalorder %v381, %v521
        %vm546 = vcmp.eq.s32.totalorder %v381, %v524
        %vm547 = vcmp.eq.s32.totalorder %v381, %v527
        %vm548 = vcmp.eq.s32.totalorder %v381, %v530
        %vm549 = vcmp.eq.s32.totalorder %v381, %v533
        %v550 = vsel %vm534, 1, 0
        %v551 = vsel %vm535, 1, 0
        %v552 = vsel %vm536, 1, 0
        %v553 = vsel %vm537, 1, 0
        %v554 = vsel %vm538, 1, 0
        %v555 = vsel %vm539, 1, 0
        %v556 = vsel %vm540, 1, 0
        %v557 = vsel %vm541, 1, 0
        %v558 = vsel %vm542, 1, 0
        %v559 = vsel %vm543, 1, 0
        %v560 = vsel %vm544, 1, 0
        %v561 = vsel %vm545, 1, 0
        %v562 = vsel %vm546, 1, 0
        %v563 = vsel %vm547, 1, 0
        %v564 = vsel %vm548, 1, 0
        %v565 = vsel %vm549, 1, 0
        %v566 = vcvt.s32.f32 %v550
        %v567 = vcvt.s32.f32 %v551
        %v568 = vcvt.s32.f32 %v552
        %v569 = vcvt.s32.f32 %v553
        %v570 = vcvt.s32.f32 %v554
        %v571 = vcvt.s32.f32 %v555
        %v572 = vcvt.s32.f32 %v556
        %v573 = vcvt.s32.f32 %v557
        %v574 = vcvt.s32.f32 %v558
        %v575 = vcvt.s32.f32 %v559
        %v576 = vcvt.s32.f32 %v560
        %v577 = vcvt.s32.f32 %v561
        %v578 = vcvt.s32.f32 %v562
        %v579 = vcvt.s32.f32 %v563
        %v580 = vcvt.s32.f32 %v564
        %v581 = vcvt.s32.f32 %v565
        %v582 = vpack.c.bf16 %v567, %v566
        %v583 = vpack.c.bf16 %v569, %v568
        %v584 = vpack.c.bf16 %v571, %v570
        %v585 = vpack.c.bf16 %v573, %v572
        %v586 = vpack.c.bf16 %v575, %v574
        %v587 = vpack.c.bf16 %v577, %v576
        %v588 = vpack.c.bf16 %v579, %v578
        %v589 = vpack.c.bf16 %v581, %v580
        %v590 = vld [vmem:[%s3] sm:$0xf]
        %v591 = vld [vmem:[%s3 + $0x4] sm:$0xf]
        %v594 = vunpack.c.l.b16 %v590
        %v595 = vunpack.c.l.b16 %v591
        %v596 = vpack.c.b16 %v595, %v594
        %vm598 = vcmask 130048
        %v600 = vsel %vm598, %v478, 0
        %v603 = vsel %vm598, %v479, 0
        %v606 = vsel %vm598, %v480, 0
        %v609 = vsel %vm598, %v481, 0
        %v612 = vsel %vm598, %v482, 0
        %v615 = vsel %vm598, %v483, 0
        %v618 = vsel %vm598, %v484, 0
        %v621 = vsel %vm598, %v485, 0
        %623 = vmatprep.subr.bf16.mxu0 0
        %624 = vmatpush1.bf16.msra.mxu0 %v596
        %625 = vmatprep.subr.bf16.mxu0 0
        %626 = vmatpush1.bf16.msra.mxu0 0
        %627 = vmatprep.subr.bf16.mxu0 0
        %628 = vmatpush1.bf16.msra.mxu0 0
        %629 = vmatprep.subr.bf16.mxu0 0
        %630 = vmatpush1.bf16.msra.mxu0 0
        %631 = vmatprep.subr.bf16.mxu0 0
        %632 = vmatpush1.bf16.msra.mxu0 0
        %633 = vmatprep.subr.bf16.mxu0 0
        %634 = vmatpush1.bf16.msra.mxu0 0
        %635 = vmatprep.subr.bf16.mxu0 0
        %636 = vmatpush1.bf16.msra.mxu0 0
        %637 = vmatprep.subr.bf16.mxu0 0
        %638 = vmatpush1.bf16.msra.mxu0 0
        %639 = vmatprep.subr.bf16.mxu0 0
        %640 = vmatpush1.bf16.msra.mxu0 0
        %641 = vmatprep.subr.bf16.mxu0 0
        %642 = vmatpush1.bf16.msra.mxu0 0
        %643 = vmatprep.subr.bf16.mxu0 0
        %644 = vmatpush1.bf16.msra.mxu0 0
        %645 = vmatprep.subr.bf16.mxu0 0
        %646 = vmatpush1.bf16.msra.mxu0 0
        %647 = vmatprep.subr.bf16.mxu0 0
        %648 = vmatpush1.bf16.msra.mxu0 0
        %649 = vmatprep.subr.bf16.mxu0 0
        %650 = vmatpush1.bf16.msra.mxu0 0
        %651 = vmatprep.subr.bf16.mxu0 0
        %652 = vmatpush1.bf16.msra.mxu0 0
        %653 = vmatprep.subr.bf16.mxu0 0
        %654 = vmatpush1.bf16.msra.mxu0 0
        %655 = vmatprep.mubr.bf16.mxu0 0
        %656 = vmatmul.mubr.bf16.gmra.mrb[0].mxu0 %v600
        %v657 = vpop.f32.mrb[0].mxu0
        %v658 = vadd.f32 0.0, %v657
        %v659 = vpop.f32.mrb[0].mxu0
        %v660 = vpop.f32.mrb[0].mxu0
        %v661 = vadd.f32 0.0, %v660
        %v662 = vpop.f32.mrb[0].mxu0
        %663 = vmatprep.mubr.bf16.mxu0 0
        %664 = vmatmul.mubr.bf16.gmra.mrb[0].mxu0 %v603
        %v665 = vpop.f32.mrb[0].mxu0
        %v666 = vadd.f32 0.0, %v665
        %v667 = vpop.f32.mrb[0].mxu0
        %v668 = vpop.f32.mrb[0].mxu0
        %v669 = vadd.f32 0.0, %v668
        %v670 = vpop.f32.mrb[0].mxu0
        %671 = vmatprep.mubr.bf16.mxu0 0
        %672 = vmatmul.mubr.bf16.gmra.mrb[0].mxu0 %v606
        %v673 = vpop.f32.mrb[0].mxu0
        %v674 = vadd.f32 0.0, %v673
        %v675 = vpop.f32.mrb[0].mxu0
        %v676 = vpop.f32.mrb[0].mxu0
        %v677 = vadd.f32 0.0, %v676
        %v678 = vpop.f32.mrb[0].mxu0
        %679 = vmatprep.mubr.bf16.mxu0 0
        %680 = vmatmul.mubr.bf16.gmra.mrb[0].mxu0 %v609
        %v681 = vpop.f32.mrb[0].mxu0
        %v682 = vadd.f32 0.0, %v681
        %v683 = vpop.f32.mrb[0].mxu0
        %v684 = vpop.f32.mrb[0].mxu0
        %v685 = vadd.f32 0.0, %v684
        %v686 = vpop.f32.mrb[0].mxu0
        %687 = vmatprep.mubr.bf16.mxu0 0
        %688 = vmatmul.mubr.bf16.gmra.mrb[0].mxu0 %v612
        %v689 = vpop.f32.mrb[0].mxu0
        %v690 = vadd.f32 0.0, %v689
        %v691 = vpop.f32.mrb[0].mxu0
        %v692 = vpop.f32.mrb[0].mxu0
        %v693 = vadd.f32 0.0, %v692
        %v694 = vpop.f32.mrb[0].mxu0
        %695 = vmatprep.mubr.bf16.mxu0 0
        %696 = vmatmul.mubr.bf16.gmra.mrb[0].mxu0 %v615
        %v697 = vpop.f32.mrb[0].mxu0
        %v698 = vadd.f32 0.0, %v697
        %v699 = vpop.f32.mrb[0].mxu0
        %v700 = vpop.f32.mrb[0].mxu0
        %v701 = vadd.f32 0.0, %v700
        %v702 = vpop.f32.mrb[0].mxu0
        %703 = vmatprep.mubr.bf16.mxu0 0
        %704 = vmatmul.mubr.bf16.gmra.mrb[0].mxu0 %v618
        %v705 = vpop.f32.mrb[0].mxu0
        %v706 = vadd.f32 0.0, %v705
        %v707 = vpop.f32.mrb[0].mxu0
        %v708 = vpop.f32.mrb[0].mxu0
        %v709 = vadd.f32 0.0, %v708
        %v710 = vpop.f32.mrb[0].mxu0
        %711 = vmatprep.mubr.bf16.mxu0 0
        %712 = vmatmul.mubr.bf16.gmra.mrb[0].mxu0 %v621
        %v713 = vpop.f32.mrb[0].mxu0
        %v714 = vadd.f32 0.0, %v713
        %v715 = vpop.f32.mrb[0].mxu0
        %v716 = vpop.f32.mrb[0].mxu0
        %v717 = vadd.f32 0.0, %v716
        %v718 = vpop.f32.mrb[0].mxu0
        %719 = vdwg.mxu0
        %v720 = vld [vmem:[%s4] sm:$0xf]
        %v721 = vld [vmem:[%s4 + $0x4] sm:$0xf]
        %v724 = vunpack.c.l.b16 %v720
        %v725 = vunpack.c.l.b16 %v721
        %v726 = vpack.c.b16 %v725, %v724
        %v729 = vsel %vm598, %v582, 0
        %v732 = vsel %vm598, %v583, 0
        %v735 = vsel %vm598, %v584, 0
        %v738 = vsel %vm598, %v585, 0
        %v741 = vsel %vm598, %v586, 0
        %v744 = vsel %vm598, %v587, 0
        %v747 = vsel %vm598, %v588, 0
        %v750 = vsel %vm598, %v589, 0
        %752 = vmatprep.subr.bf16.mxu0 0
        %753 = vmatpush1.bf16.msra.mxu0 %v726
        %754 = vmatprep.subr.bf16.mxu0 0
        %755 = vmatpush1.bf16.msra.mxu0 0
        %756 = vmatprep.subr.bf16.mxu0 0
        %757 = vmatpush1.bf16.msra.mxu0 0
        %758 = vmatprep.subr.bf16.mxu0 0
        %759 = vmatpush1.bf16.msra.mxu0 0
        %760 = vmatprep.subr.bf16.mxu0 0
        %761 = vmatpush1.bf16.msra.mxu0 0
        %762 = vmatprep.subr.bf16.mxu0 0
        %763 = vmatpush1.bf16.msra.mxu0 0
        %764 = vmatprep.subr.bf16.mxu0 0
        %765 = vmatpush1.bf16.msra.mxu0 0
        %766 = vmatprep.subr.bf16.mxu0 0
        %767 = vmatpush1.bf16.msra.mxu0 0
        %768 = vmatprep.subr.bf16.mxu0 0
        %769 = vmatpush1.bf16.msra.mxu0 0
        %770 = vmatprep.subr.bf16.mxu0 0
        %771 = vmatpush1.bf16.msra.mxu0 0
        %772 = vmatprep.subr.bf16.mxu0 0
        %773 = vmatpush1.bf16.msra.mxu0 0
        %774 = vmatprep.subr.bf16.mxu0 0
        %775 = vmatpush1.bf16.msra.mxu0 0
        %776 = vmatprep.subr.bf16.mxu0 0
        %777 = vmatpush1.bf16.msra.mxu0 0
        %778 = vmatprep.subr.bf16.mxu0 0
        %779 = vmatpush1.bf16.msra.mxu0 0
        %780 = vmatprep.subr.bf16.mxu0 0
        %781 = vmatpush1.bf16.msra.mxu0 0
        %782 = vmatprep.subr.bf16.mxu0 0
        %783 = vmatpush1.bf16.msra.mxu0 0
        %784 = vmatprep.mubr.bf16.mxu0 0
        %785 = vmatmul.mubr.bf16.gmra.mrb[0].mxu0 %v729
        %v786 = vpop.f32.mrb[0].mxu0
        %v787 = vadd.f32 0.0, %v786
        %v788 = vpop.f32.mrb[0].mxu0
        %v789 = vpop.f32.mrb[0].mxu0
        %v790 = vadd.f32 0.0, %v789
        %v791 = vpop.f32.mrb[0].mxu0
        %792 = vmatprep.mubr.bf16.mxu0 0
        %793 = vmatmul.mubr.bf16.gmra.mrb[0].mxu0 %v732
        %v794 = vpop.f32.mrb[0].mxu0
        %v795 = vadd.f32 0.0, %v794
        %v796 = vpop.f32.mrb[0].mxu0
        %v797 = vpop.f32.mrb[0].mxu0
        %v798 = vadd.f32 0.0, %v797
        %v799 = vpop.f32.mrb[0].mxu0
        %800 = vmatprep.mubr.bf16.mxu0 0
        %801 = vmatmul.mubr.bf16.gmra.mrb[0].mxu0 %v735
        %v802 = vpop.f32.mrb[0].mxu0
        %v803 = vadd.f32 0.0, %v802
        %v804 = vpop.f32.mrb[0].mxu0
        %v805 = vpop.f32.mrb[0].mxu0
        %v806 = vadd.f32 0.0, %v805
        %v807 = vpop.f32.mrb[0].mxu0
        %808 = vmatprep.mubr.bf16.mxu0 0
        %809 = vmatmul.mubr.bf16.gmra.mrb[0].mxu0 %v738
        %v810 = vpop.f32.mrb[0].mxu0
        %v811 = vadd.f32 0.0, %v810
        %v812 = vpop.f32.mrb[0].mxu0
        %v813 = vpop.f32.mrb[0].mxu0
        %v814 = vadd.f32 0.0, %v813
        %v815 = vpop.f32.mrb[0].mxu0
        %816 = vmatprep.mubr.bf16.mxu0 0
        %817 = vmatmul.mubr.bf16.gmra.mrb[0].mxu0 %v741
        %v818 = vpop.f32.mrb[0].mxu0
        %v819 = vadd.f32 0.0, %v818
        %v820 = vpop.f32.mrb[0].mxu0
        %v821 = vpop.f32.mrb[0].mxu0
        %v822 = vadd.f32 0.0, %v821
        %v823 = vpop.f32.mrb[0].mxu0
        %824 = vmatprep.mubr.bf16.mxu0 0
        %825 = vmatmul.mubr.bf16.gmra.mrb[0].mxu0 %v744
        %v826 = vpop.f32.mrb[0].mxu0
        %v827 = vadd.f32 0.0, %v826
        %v828 = vpop.f32.mrb[0].mxu0
        %v829 = vpop.f32.mrb[0].mxu0
        %v830 = vadd.f32 0.0, %v829
        %v831 = vpop.f32.mrb[0].mxu0
        %832 = vmatprep.mubr.bf16.mxu0 0
        %833 = vmatmul.mubr.bf16.gmra.mrb[0].mxu0 %v747
        %v834 = vpop.f32.mrb[0].mxu0
        %v835 = vadd.f32 0.0, %v834
        %v836 = vpop.f32.mrb[0].mxu0
        %v837 = vpop.f32.mrb[0].mxu0
        %v838 = vadd.f32 0.0, %v837
        %v839 = vpop.f32.mrb[0].mxu0
        %840 = vmatprep.mubr.bf16.mxu0 0
        %841 = vmatmul.mubr.bf16.gmra.mrb[0].mxu0 %v750
        %v842 = vpop.f32.mrb[0].mxu0
        %v843 = vadd.f32 0.0, %v842
        %v844 = vpop.f32.mrb[0].mxu0
        %v845 = vpop.f32.mrb[0].mxu0
        %v846 = vadd.f32 0.0, %v845
        %v847 = vpop.f32.mrb[0].mxu0
        %848 = vdwg.mxu0
        %v849 = vmul.f32 %v658, %v787
        %v850 = vmul.f32 %v661, %v790
        %v851 = vmul.f32 %v666, %v795
        %v852 = vmul.f32 %v669, %v798
        %v853 = vmul.f32 %v674, %v803
        %v854 = vmul.f32 %v677, %v806
        %v855 = vmul.f32 %v682, %v811
        %v856 = vmul.f32 %v685, %v814
        %v857 = vmul.f32 %v690, %v819
        %v858 = vmul.f32 %v693, %v822
        %v859 = vmul.f32 %v698, %v827
        %v860 = vmul.f32 %v701, %v830
        %v861 = vmul.f32 %v706, %v835
        %v862 = vmul.f32 %v709, %v838
        %v863 = vmul.f32 %v714, %v843
        %v864 = vmul.f32 %v717, %v846
        %v865 = vld [vmem:[%s5] sm:$0xff]
        %v866 = vld [vmem:[%s5 + $0x8] sm:$0xff]
        %v867 = vld [vmem:[%s5 + $0x10] sm:$0xff]
        %v868 = vld [vmem:[%s5 + $0x18] sm:$0xff]
        %v869 = vld [vmem:[%s334] sm:$0xff]
        %v870 = vld [vmem:[%s334 + $0x8] sm:$0xff]
        %v871 = vld [vmem:[%s334 + $0x10] sm:$0xff]
        %v872 = vld [vmem:[%s334 + $0x18] sm:$0xff]
        %v873 = vld [vmem:[%s334 + $0x20] sm:$0xff]
        %v874 = vld [vmem:[%s334 + $0x28] sm:$0xff]
        %v875 = vld [vmem:[%s334 + $0x30] sm:$0xff]
        %v876 = vld [vmem:[%s334 + $0x38] sm:$0xff]
        %v877 = vld [vmem:[%s334 + $0x40] sm:$0xff]
        %v878 = vld [vmem:[%s334 + $0x48] sm:$0xff]
        %v879 = vld [vmem:[%s334 + $0x50] sm:$0xff]
        %v880 = vld [vmem:[%s334 + $0x58] sm:$0xff]
        %v881 = vld [vmem:[%s334 + $0x60] sm:$0xff]
        %v882 = vld [vmem:[%s334 + $0x68] sm:$0xff]
        %v883 = vld [vmem:[%s334 + $0x70] sm:$0xff]
        %v884 = vld [vmem:[%s334 + $0x78] sm:$0xff]
        %vm885 = vcmask 261120
        %v887 = vsel %vm885, %v849, 0
        %v890 = vsel %vm885, %v850, 0
        %v893 = vsel %vm885, %v851, 0
        %v896 = vsel %vm885, %v852, 0
        %v899 = vsel %vm885, %v853, 0
        %v902 = vsel %vm885, %v854, 0
        %v905 = vsel %vm885, %v855, 0
        %v908 = vsel %vm885, %v856, 0
        %v911 = vsel %vm885, %v857, 0
        %v914 = vsel %vm885, %v858, 0
        %v917 = vsel %vm885, %v859, 0
        %v920 = vsel %vm885, %v860, 0
        %v923 = vsel %vm885, %v861, 0
        %v926 = vsel %vm885, %v862, 0
        %v929 = vsel %vm885, %v863, 0
        %v932 = vsel %vm885, %v864, 0
        %934 = vmatprep.subr.mxu0 0.0
        %935 = vmatpush1.msra.mxu0 %v865
        %936 = vmatprep.subr.mxu0 0.0
        %937 = vmatpush1.msra.mxu0 %v866
        %938 = vmatprep.subr.mxu0 0.0
        %939 = vmatpush1.msra.mxu0 %v867
        %940 = vmatprep.subr.mxu0 0.0
        %941 = vmatpush1.msra.mxu0 %v868
        %942 = vmatprep.subr.mxu0 0.0
        %943 = vmatpush1.msra.mxu0 0.0
        %944 = vmatprep.subr.mxu0 0.0
        %945 = vmatpush1.msra.mxu0 0.0
        %946 = vmatprep.subr.mxu0 0.0
        %947 = vmatpush1.msra.mxu0 0.0
        %948 = vmatprep.subr.mxu0 0.0
        %949 = vmatpush1.msra.mxu0 0.0
        %950 = vmatprep.subr.mxu0 0.0
        %951 = vmatpush1.msra.mxu0 0.0
        %952 = vmatprep.subr.mxu0 0.0
        %953 = vmatpush1.msra.mxu0 0.0
        %954 = vmatprep.subr.mxu0 0.0
        %955 = vmatpush1.msra.mxu0 0.0
        %956 = vmatprep.subr.mxu0 0.0
        %957 = vmatpush1.msra.mxu0 0.0
        %958 = vmatprep.subr.mxu0 0.0
        %959 = vmatpush1.msra.mxu0 0.0
        %960 = vmatprep.subr.mxu0 0.0
        %961 = vmatpush1.msra.mxu0 0.0
        %962 = vmatprep.subr.mxu0 0.0
        %963 = vmatpush1.msra.mxu0 0.0
        %964 = vmatprep.subr.mxu0 0.0
        %965 = vmatpush1.msra.mxu0 0.0
        %966 = vmatprep.subr.mxu0 0.0
        %967 = vmatpush1.msra.mxu0 0.0
        %968 = vmatprep.subr.mxu0 0.0
        %969 = vmatpush1.msra.mxu0 0.0
        %970 = vmatprep.subr.mxu0 0.0
        %971 = vmatpush1.msra.mxu0 0.0
        %972 = vmatprep.subr.mxu0 0.0
        %973 = vmatpush1.msra.mxu0 0.0
        %974 = vmatprep.subr.mxu0 0.0
        %975 = vmatpush1.msra.mxu0 0.0
        %976 = vmatprep.subr.mxu0 0.0
        %977 = vmatpush1.msra.mxu0 0.0
        %978 = vmatprep.subr.mxu0 0.0
        %979 = vmatpush1.msra.mxu0 0.0
        %980 = vmatprep.subr.mxu0 0.0
        %981 = vmatpush1.msra.mxu0 0.0
        %982 = vmatprep.subr.mxu0 0.0
        %983 = vmatpush1.msra.mxu0 0.0
        %984 = vmatprep.subr.mxu0 0.0
        %985 = vmatpush1.msra.mxu0 0.0
        %986 = vmatprep.subr.mxu0 0.0
        %987 = vmatpush1.msra.mxu0 0.0
        %988 = vmatprep.subr.mxu0 0.0
        %989 = vmatpush1.msra.mxu0 0.0
        %990 = vmatprep.subr.mxu0 0.0
        %991 = vmatpush1.msra.mxu0 0.0
        %992 = vmatprep.subr.mxu0 0.0
        %993 = vmatpush1.msra.mxu0 0.0
        %994 = vmatprep.subr.mxu0 0.0
        %995 = vmatpush1.msra.mxu0 0.0
        %996 = vmatprep.subr.mxu0 0.0
        %997 = vmatpush1.msra.mxu0 0.0
        %998 = vmatprep.mubr.f32.mxu0 0.0
        %999 = vmatmul.mubr.f32.gmra.mrb[0].mxu0 %v887
        %v1000 = vpop.f32.mrb[0].mxu0
        %v1001 = vadd.f32 %v869, %v1000
        %v1002 = vpop.f32.mrb[0].mxu0
        %1003 = vmatprep.mubr.f32.mxu0 0.0
        %1004 = vmatmul.mubr.f32.gmra.mrb[0].mxu0 %v890
        %v1005 = vpop.f32.mrb[0].mxu0
        %v1006 = vadd.f32 %v870, %v1005
        %v1007 = vpop.f32.mrb[0].mxu0
        %1008 = vmatprep.mubr.f32.mxu0 0.0
        %1009 = vmatmul.mubr.f32.gmra.mrb[0].mxu0 %v893
        %v1010 = vpop.f32.mrb[0].mxu0
        %v1011 = vadd.f32 %v871, %v1010
        %v1012 = vpop.f32.mrb[0].mxu0
        %1013 = vmatprep.mubr.f32.mxu0 0.0
        %1014 = vmatmul.mubr.f32.gmra.mrb[0].mxu0 %v896
        %v1015 = vpop.f32.mrb[0].mxu0
        %v1016 = vadd.f32 %v872, %v1015
        %v1017 = vpop.f32.mrb[0].mxu0
        %1018 = vmatprep.mubr.f32.mxu0 0.0
        %1019 = vmatmul.mubr.f32.gmra.mrb[0].mxu0 %v899
        %v1020 = vpop.f32.mrb[0].mxu0
        %v1021 = vadd.f32 %v873, %v1020
        %v1022 = vpop.f32.mrb[0].mxu0
        %1023 = vmatprep.mubr.f32.mxu0 0.0
        %1024 = vmatmul.mubr.f32.gmra.mrb[0].mxu0 %v902
        %v1025 = vpop.f32.mrb[0].mxu0
        %v1026 = vadd.f32 %v874, %v1025
        %v1027 = vpop.f32.mrb[0].mxu0
        %1028 = vmatprep.mubr.f32.mxu0 0.0
        %1029 = vmatmul.mubr.f32.gmra.mrb[0].mxu0 %v905
        %v1030 = vpop.f32.mrb[0].mxu0
        %v1031 = vadd.f32 %v875, %v1030
        %v1032 = vpop.f32.mrb[0].mxu0
        %1033 = vmatprep.mubr.f32.mxu0 0.0
        %1034 = vmatmul.mubr.f32.gmra.mrb[0].mxu0 %v908
        %v1035 = vpop.f32.mrb[0].mxu0
        %v1036 = vadd.f32 %v876, %v1035
        %v1037 = vpop.f32.mrb[0].mxu0
        %1038 = vmatprep.mubr.f32.mxu0 0.0
        %1039 = vmatmul.mubr.f32.gmra.mrb[0].mxu0 %v911
        %v1040 = vpop.f32.mrb[0].mxu0
        %v1041 = vadd.f32 %v877, %v1040
        %v1042 = vpop.f32.mrb[0].mxu0
        %1043 = vmatprep.mubr.f32.mxu0 0.0
        %1044 = vmatmul.mubr.f32.gmra.mrb[0].mxu0 %v914
        %v1045 = vpop.f32.mrb[0].mxu0
        %v1046 = vadd.f32 %v878, %v1045
        %v1047 = vpop.f32.mrb[0].mxu0
        %1048 = vmatprep.mubr.f32.mxu0 0.0
        %1049 = vmatmul.mubr.f32.gmra.mrb[0].mxu0 %v917
        %v1050 = vpop.f32.mrb[0].mxu0
        %v1051 = vadd.f32 %v879, %v1050
        %v1052 = vpop.f32.mrb[0].mxu0
        %1053 = vmatprep.mubr.f32.mxu0 0.0
        %1054 = vmatmul.mubr.f32.gmra.mrb[0].mxu0 %v920
        %v1055 = vpop.f32.mrb[0].mxu0
        %v1056 = vadd.f32 %v880, %v1055
        %v1057 = vpop.f32.mrb[0].mxu0
        %1058 = vmatprep.mubr.f32.mxu0 0.0
        %1059 = vmatmul.mubr.f32.gmra.mrb[0].mxu0 %v923
        %v1060 = vpop.f32.mrb[0].mxu0
        %v1061 = vadd.f32 %v881, %v1060
        %v1062 = vpop.f32.mrb[0].mxu0
        %1063 = vmatprep.mubr.f32.mxu0 0.0
        %1064 = vmatmul.mubr.f32.gmra.mrb[0].mxu0 %v926
        %v1065 = vpop.f32.mrb[0].mxu0
        %v1066 = vadd.f32 %v882, %v1065
        %v1067 = vpop.f32.mrb[0].mxu0
        %1068 = vmatprep.mubr.f32.mxu0 0.0
        %1069 = vmatmul.mubr.f32.gmra.mrb[0].mxu0 %v929
        %v1070 = vpop.f32.mrb[0].mxu0
        %v1071 = vadd.f32 %v883, %v1070
        %v1072 = vpop.f32.mrb[0].mxu0
        %1073 = vmatprep.mubr.f32.mxu0 0.0
        %1074 = vmatmul.mubr.f32.gmra.mrb[0].mxu0 %v932
        %v1075 = vpop.f32.mrb[0].mxu0
        %v1076 = vadd.f32 %v884, %v1075
        %v1077 = vpop.f32.mrb[0].mxu0
        %1078 = vdwg.mxu0
        %vm1079 = vcmp.lt.s32.totalorder %v348, 16
        %vm1080 = vcmp.lt.s32.totalorder %v349, 16
        %vm1081 = vcmp.lt.s32.totalorder %v350, 16
        %vm1082 = vcmp.lt.s32.totalorder %v351, 16
        %vm1083 = vcmp.lt.s32.totalorder %v352, 16
        %vm1084 = vcmp.lt.s32.totalorder %v353, 16
        %vm1085 = vcmp.lt.s32.totalorder %v354, 16
        %vm1086 = vcmp.lt.s32.totalorder %v355, 16
        %vm1087 = vcmp.lt.s32.totalorder %v356, 16
        %vm1088 = vcmp.lt.s32.totalorder %v357, 16
        %vm1089 = vcmp.lt.s32.totalorder %v358, 16
        %vm1090 = vcmp.lt.s32.totalorder %v359, 16
        %vm1091 = vcmp.lt.s32.totalorder %v360, 16
        %vm1092 = vcmp.lt.s32.totalorder %v361, 16
        %vm1093 = vcmp.lt.s32.totalorder %v362, 16
        %vm1094 = vcmp.lt.s32.totalorder %v363, 16
        %v1095 = vsel %vm1079, 1, 0
        %v1096 = vsel %vm1080, 1, 0
        %v1097 = vsel %vm1081, 1, 0
        %v1098 = vsel %vm1082, 1, 0
        %v1099 = vsel %vm1083, 1, 0
        %v1100 = vsel %vm1084, 1, 0
        %v1101 = vsel %vm1085, 1, 0
        %v1102 = vsel %vm1086, 1, 0
        %v1103 = vsel %vm1087, 1, 0
        %v1104 = vsel %vm1088, 1, 0
        %v1105 = vsel %vm1089, 1, 0
        %v1106 = vsel %vm1090, 1, 0
        %v1107 = vsel %vm1091, 1, 0
        %v1108 = vsel %vm1092, 1, 0
        %v1109 = vsel %vm1093, 1, 0
        %v1110 = vsel %vm1094, 1, 0
        %1111 = vset.pattern.permute.xlu0 0
        %1112 = vperm.xlu0 %1111, %v1095
        %v1113 = vpop.permute.xlu0 %1112
        %1114 = vset.pattern.permute.xlu0 0
        %1115 = vperm.xlu0 %1114, %v1096
        %v1116 = vpop.permute.xlu0 %1115
        %1117 = vset.pattern.permute.xlu0 0
        %1118 = vperm.xlu0 %1117, %v1097
        %v1119 = vpop.permute.xlu0 %1118
        %1120 = vset.pattern.permute.xlu0 0
        %1121 = vperm.xlu0 %1120, %v1098
        %v1122 = vpop.permute.xlu0 %1121
        %1123 = vset.pattern.permute.xlu0 0
        %1124 = vperm.xlu0 %1123, %v1099
        %v1125 = vpop.permute.xlu0 %1124
        %1126 = vset.pattern.permute.xlu0 0
        %1127 = vperm.xlu0 %1126, %v1100
        %v1128 = vpop.permute.xlu0 %1127
        %1129 = vset.pattern.permute.xlu0 0
        %1130 = vperm.xlu0 %1129, %v1101
        %v1131 = vpop.permute.xlu0 %1130
        %1132 = vset.pattern.permute.xlu0 0
        %1133 = vperm.xlu0 %1132, %v1102
        %v1134 = vpop.permute.xlu0 %1133
        %1135 = vset.pattern.permute.xlu0 0
        %1136 = vperm.xlu0 %1135, %v1103
        %v1137 = vpop.permute.xlu0 %1136
        %1138 = vset.pattern.permute.xlu0 0
        %1139 = vperm.xlu0 %1138, %v1104
        %v1140 = vpop.permute.xlu0 %1139
        %1141 = vset.pattern.permute.xlu0 0
        %1142 = vperm.xlu0 %1141, %v1105
        %v1143 = vpop.permute.xlu0 %1142
        %1144 = vset.pattern.permute.xlu0 0
        %1145 = vperm.xlu0 %1144, %v1106
        %v1146 = vpop.permute.xlu0 %1145
        %1147 = vset.pattern.permute.xlu0 0
        %1148 = vperm.xlu0 %1147, %v1107
        %v1149 = vpop.permute.xlu0 %1148
        %1150 = vset.pattern.permute.xlu0 0
        %1151 = vperm.xlu0 %1150, %v1108
        %v1152 = vpop.permute.xlu0 %1151
        %1153 = vset.pattern.permute.xlu0 0
        %1154 = vperm.xlu0 %1153, %v1109
        %v1155 = vpop.permute.xlu0 %1154
        %1156 = vset.pattern.permute.xlu0 0
        %1157 = vperm.xlu0 %1156, %v1110
        %v1158 = vpop.permute.xlu0 %1157
        %vm1159 = vcmp.eq.s32.totalorder %v1113, 1
        %vm1160 = vcmp.eq.s32.totalorder %v1116, 1
        %vm1161 = vcmp.eq.s32.totalorder %v1119, 1
        %vm1162 = vcmp.eq.s32.totalorder %v1122, 1
        %vm1163 = vcmp.eq.s32.totalorder %v1125, 1
        %vm1164 = vcmp.eq.s32.totalorder %v1128, 1
        %vm1165 = vcmp.eq.s32.totalorder %v1131, 1
        %vm1166 = vcmp.eq.s32.totalorder %v1134, 1
        %vm1167 = vcmp.eq.s32.totalorder %v1137, 1
        %vm1168 = vcmp.eq.s32.totalorder %v1140, 1
        %vm1169 = vcmp.eq.s32.totalorder %v1143, 1
        %vm1170 = vcmp.eq.s32.totalorder %v1146, 1
        %vm1171 = vcmp.eq.s32.totalorder %v1149, 1
        %vm1172 = vcmp.eq.s32.totalorder %v1152, 1
        %vm1173 = vcmp.eq.s32.totalorder %v1155, 1
        %vm1174 = vcmp.eq.s32.totalorder %v1158, 1
        %v1175 = vsel %vm1159, %v1001, -1e+30
        %v1176 = vsel %vm1160, %v1006, -1e+30
        %v1177 = vsel %vm1161, %v1011, -1e+30
        %v1178 = vsel %vm1162, %v1016, -1e+30
        %v1179 = vsel %vm1163, %v1021, -1e+30
        %v1180 = vsel %vm1164, %v1026, -1e+30
        %v1181 = vsel %vm1165, %v1031, -1e+30
        %v1182 = vsel %vm1166, %v1036, -1e+30
        %v1183 = vsel %vm1167, %v1041, -1e+30
        %v1184 = vsel %vm1168, %v1046, -1e+30
        %v1185 = vsel %vm1169, %v1051, -1e+30
        %v1186 = vsel %vm1170, %v1056, -1e+30
        %v1187 = vsel %vm1171, %v1061, -1e+30
        %v1188 = vsel %vm1172, %v1066, -1e+30
        %v1189 = vsel %vm1173, %v1071, -1e+30
        %v1190 = vsel %vm1174, %v1076, -1e+30
        %vm1191 = vcmask 31744
        %v1192 = vsel %vm1191, %v1175, -inf
        %v1193 = vsel %vm1191, %v1176, -inf
        %v1194 = vsel %vm1191, %v1177, -inf
        %v1195 = vsel %vm1191, %v1178, -inf
        %v1196 = vsel %vm1191, %v1179, -inf
        %v1197 = vmax.f32 %v1192, %v1196
        %v1198 = vsel %vm1191, %v1180, -inf
        %v1199 = vmax.f32 %v1193, %v1198
        %v1200 = vsel %vm1191, %v1181, -inf
        %v1201 = vmax.f32 %v1194, %v1200
        %v1202 = vsel %vm1191, %v1182, -inf
        %v1203 = vmax.f32 %v1195, %v1202
        %v1204 = vsel %vm1191, %v1183, -inf
        %v1205 = vmax.f32 %v1197, %v1204
        %v1206 = vsel %vm1191, %v1184, -inf
        %v1207 = vmax.f32 %v1199, %v1206
        %v1208 = vsel %vm1191, %v1185, -inf
        %v1209 = vmax.f32 %v1201, %v1208
        %v1210 = vsel %vm1191, %v1186, -inf
        %v1211 = vmax.f32 %v1203, %v1210
        %v1212 = vsel %vm1191, %v1187, -inf
        %v1213 = vmax.f32 %v1205, %v1212
        %v1214 = vsel %vm1191, %v1188, -inf
        %v1215 = vmax.f32 %v1207, %v1214
        %v1216 = vsel %vm1191, %v1189, -inf
        %v1217 = vmax.f32 %v1209, %v1216
        %v1218 = vsel %vm1191, %v1190, -inf
        %v1219 = vmax.f32 %v1211, %v1218
        %v1220 = vmax.f32 %v1213, %v1215
        %v1221 = vmax.f32 %v1217, %v1219
        %v1222 = vmax.f32 %v1220, %v1221
        %v1223 = vrot.slane %v1222, 4
        %v1224 = vmax.f32 %v1222, %v1223
        %v1225 = vrot.slane %v1224, 2
        %v1226 = vmax.f32 %v1224, %v1225
        %v1227 = vrot.slane %v1226, 1
        %v1228 = vmax.f32 %v1226, %v1227
        %v1229 = vld [vmem:[#allocation2] sm:$0xff]
        %v1230 = vmax.f32 %v1229, %v1228
        %1231 = vst.msk [vmem:[#allocation2] sm:$0xff] %vm1191, %v1230
        %v1232 = vsub.f32 %v1229, %v1230
        %v1233 = vmul.f32 %v1232, 1.442695
        %v1234 = vpow.pop %v1233
        %v1235 = vld [vmem:[%s6] sm:$0xf]
        %v1237 = vsel %vm1191, %v1234, 0
        %vm1239 = vcmask 1043456
        %v1241 = vsel %vm1239, %v1235, 0
        %1243 = vmatprep.subr.mxu0 0.0
        %1244 = vmatpush1.msra.mxu0 %v1241
        %1245 = vmatprep.subr.mxu0 0.0
        %1246 = vmatpush1.msra.mxu0 0.0
        %1247 = vmatprep.subr.mxu0 0.0
        %1248 = vmatpush1.msra.mxu0 0.0
        %1249 = vmatprep.subr.mxu0 0.0
        %1250 = vmatpush1.msra.mxu0 0.0
        %1251 = vmatprep.subr.mxu0 0.0
        %1252 = vmatpush1.msra.mxu0 0.0
        %1253 = vmatprep.subr.mxu0 0.0
        %1254 = vmatpush1.msra.mxu0 0.0
        %1255 = vmatprep.subr.mxu0 0.0
        %1256 = vmatpush1.msra.mxu0 0.0
        %1257 = vmatprep.subr.mxu0 0.0
        %1258 = vmatpush1.msra.mxu0 0.0
        %1259 = vmatprep.subr.mxu0 0.0
        %1260 = vmatpush1.msra.mxu0 0.0
        %1261 = vmatprep.subr.mxu0 0.0
        %1262 = vmatpush1.msra.mxu0 0.0
        %1263 = vmatprep.subr.mxu0 0.0
        %1264 = vmatpush1.msra.mxu0 0.0
        %1265 = vmatprep.subr.mxu0 0.0
        %1266 = vmatpush1.msra.mxu0 0.0
        %1267 = vmatprep.subr.mxu0 0.0
        %1268 = vmatpush1.msra.mxu0 0.0
        %1269 = vmatprep.subr.mxu0 0.0
        %1270 = vmatpush1.msra.mxu0 0.0
        %1271 = vmatprep.subr.mxu0 0.0
        %1272 = vmatpush1.msra.mxu0 0.0
        %1273 = vmatprep.subr.mxu0 0.0
        %1274 = vmatpush1.msra.mxu0 0.0
        %1275 = vmatprep.subr.mxu0 0.0
        %1276 = vmatpush1.msra.mxu0 0.0
        %1277 = vmatprep.subr.mxu0 0.0
        %1278 = vmatpush1.msra.mxu0 0.0
        %1279 = vmatprep.subr.mxu0 0.0
        %1280 = vmatpush1.msra.mxu0 0.0
        %1281 = vmatprep.subr.mxu0 0.0
        %1282 = vmatpush1.msra.mxu0 0.0
        %1283 = vmatprep.subr.mxu0 0.0
        %1284 = vmatpush1.msra.mxu0 0.0
        %1285 = vmatprep.subr.mxu0 0.0
        %1286 = vmatpush1.msra.mxu0 0.0
        %1287 = vmatprep.subr.mxu0 0.0
        %1288 = vmatpush1.msra.mxu0 0.0
        %1289 = vmatprep.subr.mxu0 0.0
        %1290 = vmatpush1.msra.mxu0 0.0
        %1291 = vmatprep.subr.mxu0 0.0
        %1292 = vmatpush1.msra.mxu0 0.0
        %1293 = vmatprep.subr.mxu0 0.0
        %1294 = vmatpush1.msra.mxu0 0.0
        %1295 = vmatprep.subr.mxu0 0.0
        %1296 = vmatpush1.msra.mxu0 0.0
        %1297 = vmatprep.subr.mxu0 0.0
        %1298 = vmatpush1.msra.mxu0 0.0
        %1299 = vmatprep.subr.mxu0 0.0
        %1300 = vmatpush1.msra.mxu0 0.0
        %1301 = vmatprep.subr.mxu0 0.0
        %1302 = vmatpush1.msra.mxu0 0.0
        %1303 = vmatprep.subr.mxu0 0.0
        %1304 = vmatpush1.msra.mxu0 0.0
        %1305 = vmatprep.subr.mxu0 0.0
        %1306 = vmatpush1.msra.mxu0 0.0
        %1307 = vmatprep.mubr.f32.mxu0 0.0
        %1308 = vmatmul.mubr.f32.gmra.mrb[0].mxu0 %v1237
        %v1309 = vpop.f32.mrb[0].mxu0
        %v1310 = vadd.f32 0.0, %v1309
        %v1311 = vpop.f32.mrb[0].mxu0
        %1312 = vdwg.mxu0
        %v1313 = vlaneseq
        %v1314 = vshrl.u32 %v1313, 7
        %v1315 = vsub.s32 0, %v1314
        %v1316 = vrot.slane %v1230, %v1315
        %v1317 = vsub.f32 %v1175, %v1316
        %v1318 = vsub.f32 %v1176, %v1316
        %v1319 = vsub.f32 %v1177, %v1316
        %v1320 = vsub.f32 %v1178, %v1316
        %v1321 = vsub.f32 %v1179, %v1316
        %v1322 = vsub.f32 %v1180, %v1316
        %v1323 = vsub.f32 %v1181, %v1316
        %v1324 = vsub.f32 %v1182, %v1316
        %v1325 = vsub.f32 %v1183, %v1316
        %v1326 = vsub.f32 %v1184, %v1316
        %v1327 = vsub.f32 %v1185, %v1316
        %v1328 = vsub.f32 %v1186, %v1316
        %v1329 = vsub.f32 %v1187, %v1316
        %v1330 = vsub.f32 %v1188, %v1316
        %v1331 = vsub.f32 %v1189, %v1316
        %v1332 = vsub.f32 %v1190, %v1316
        %v1333 = vmul.f32 %v1317, 1.442695
        %v1334 = vpow.pop %v1333
        %v1335 = vmul.f32 %v1318, 1.442695
        %v1336 = vpow.pop %v1335
        %v1337 = vmul.f32 %v1319, 1.442695
        %v1338 = vpow.pop %v1337
        %v1339 = vmul.f32 %v1320, 1.442695
        %v1340 = vpow.pop %v1339
        %v1341 = vmul.f32 %v1321, 1.442695
        %v1342 = vpow.pop %v1341
        %v1343 = vmul.f32 %v1322, 1.442695
        %v1344 = vpow.pop %v1343
        %v1345 = vmul.f32 %v1323, 1.442695
        %v1346 = vpow.pop %v1345
        %v1347 = vmul.f32 %v1324, 1.442695
        %v1348 = vpow.pop %v1347
        %v1349 = vmul.f32 %v1325, 1.442695
        %v1350 = vpow.pop %v1349
        %v1351 = vmul.f32 %v1326, 1.442695
        %v1352 = vpow.pop %v1351
        %v1353 = vmul.f32 %v1327, 1.442695
        %v1354 = vpow.pop %v1353
        %v1355 = vmul.f32 %v1328, 1.442695
        %v1356 = vpow.pop %v1355
        %v1357 = vmul.f32 %v1329, 1.442695
        %v1358 = vpow.pop %v1357
        %v1359 = vmul.f32 %v1330, 1.442695
        %v1360 = vpow.pop %v1359
        %v1361 = vmul.f32 %v1331, 1.442695
        %v1362 = vpow.pop %v1361
        %v1363 = vmul.f32 %v1332, 1.442695
        %v1364 = vpow.pop %v1363
        %v1366 = vsel %vm1191, %v1334, 0
        %v1369 = vsel %vm1191, %v1336, 0
        %v1372 = vsel %vm1191, %v1338, 0
        %v1375 = vsel %vm1191, %v1340, 0
        %v1378 = vsel %vm1191, %v1342, 0
        %v1381 = vsel %vm1191, %v1344, 0
        %v1384 = vsel %vm1191, %v1346, 0
        %v1387 = vsel %vm1191, %v1348, 0
        %v1390 = vsel %vm1191, %v1350, 0
        %v1393 = vsel %vm1191, %v1352, 0
        %v1396 = vsel %vm1191, %v1354, 0
        %v1399 = vsel %vm1191, %v1356, 0
        %v1402 = vsel %vm1191, %v1358, 0
        %v1405 = vsel %vm1191, %v1360, 0
        %v1408 = vsel %vm1191, %v1362, 0
        %v1411 = vsel %vm1191, %v1364, 0
        %1413 = vmatprep.subr.mxu0 0.0
        %1414 = vmatpush1.msra.mxu0 %v1241
        %1415 = vmatprep.subr.mxu0 0.0
        %1416 = vmatpush1.msra.mxu0 0.0
        %1417 = vmatprep.subr.mxu0 0.0
        %1418 = vmatpush1.msra.mxu0 0.0
        %1419 = vmatprep.subr.mxu0 0.0
        %1420 = vmatpush1.msra.mxu0 0.0
        %1421 = vmatprep.subr.mxu0 0.0
        %1422 = vmatpush1.msra.mxu0 0.0
        %1423 = vmatprep.subr.mxu0 0.0
        %1424 = vmatpush1.msra.mxu0 0.0
        %1425 = vmatprep.subr.mxu0 0.0
        %1426 = vmatpush1.msra.mxu0 0.0
        %1427 = vmatprep.subr.mxu0 0.0
        %1428 = vmatpush1.msra.mxu0 0.0
        %1429 = vmatprep.subr.mxu0 0.0
        %1430 = vmatpush1.msra.mxu0 0.0
        %1431 = vmatprep.subr.mxu0 0.0
        %1432 = vmatpush1.msra.mxu0 0.0
        %1433 = vmatprep.subr.mxu0 0.0
        %1434 = vmatpush1.msra.mxu0 0.0
        %1435 = vmatprep.subr.mxu0 0.0
        %1436 = vmatpush1.msra.mxu0 0.0
        %1437 = vmatprep.subr.mxu0 0.0
        %1438 = vmatpush1.msra.mxu0 0.0
        %1439 = vmatprep.subr.mxu0 0.0
        %1440 = vmatpush1.msra.mxu0 0.0
        %1441 = vmatprep.subr.mxu0 0.0
        %1442 = vmatpush1.msra.mxu0 0.0
        %1443 = vmatprep.subr.mxu0 0.0
        %1444 = vmatpush1.msra.mxu0 0.0
        %1445 = vmatprep.subr.mxu0 0.0
        %1446 = vmatpush1.msra.mxu0 0.0
        %1447 = vmatprep.subr.mxu0 0.0
        %1448 = vmatpush1.msra.mxu0 0.0
        %1449 = vmatprep.subr.mxu0 0.0
        %1450 = vmatpush1.msra.mxu0 0.0
        %1451 = vmatprep.subr.mxu0 0.0
        %1452 = vmatpush1.msra.mxu0 0.0
        %1453 = vmatprep.subr.mxu0 0.0
        %1454 = vmatpush1.msra.mxu0 0.0
        %1455 = vmatprep.subr.mxu0 0.0
        %1456 = vmatpush1.msra.mxu0 0.0
        %1457 = vmatprep.subr.mxu0 0.0
        %1458 = vmatpush1.msra.mxu0 0.0
        %1459 = vmatprep.subr.mxu0 0.0
        %1460 = vmatpush1.msra.mxu0 0.0
        %1461 = vmatprep.subr.mxu0 0.0
        %1462 = vmatpush1.msra.mxu0 0.0
        %1463 = vmatprep.subr.mxu0 0.0
        %1464 = vmatpush1.msra.mxu0 0.0
        %1465 = vmatprep.subr.mxu0 0.0
        %1466 = vmatpush1.msra.mxu0 0.0
        %1467 = vmatprep.subr.mxu0 0.0
        %1468 = vmatpush1.msra.mxu0 0.0
        %1469 = vmatprep.subr.mxu0 0.0
        %1470 = vmatpush1.msra.mxu0 0.0
        %1471 = vmatprep.subr.mxu0 0.0
        %1472 = vmatpush1.msra.mxu0 0.0
        %1473 = vmatprep.subr.mxu0 0.0
        %1474 = vmatpush1.msra.mxu0 0.0
        %1475 = vmatprep.subr.mxu0 0.0
        %1476 = vmatpush1.msra.mxu0 0.0
        %1477 = vmatprep.mubr.f32.mxu0 0.0
        %1478 = vmatmul.mubr.f32.gmra.mrb[0].mxu0 %v1366
        %v1479 = vpop.f32.mrb[0].mxu0
        %v1480 = vadd.f32 0.0, %v1479
        %v1481 = vpop.f32.mrb[0].mxu0
        %1482 = vmatprep.mubr.f32.mxu0 0.0
        %1483 = vmatmul.mubr.f32.gmra.mrb[0].mxu0 %v1369
        %v1484 = vpop.f32.mrb[0].mxu0
        %v1485 = vadd.f32 0.0, %v1484
        %v1486 = vpop.f32.mrb[0].mxu0
        %1487 = vmatprep.mubr.f32.mxu0 0.0
        %1488 = vmatmul.mubr.f32.gmra.mrb[0].mxu0 %v1372
        %v1489 = vpop.f32.mrb[0].mxu0
        %v1490 = vadd.f32 0.0, %v1489
        %v1491 = vpop.f32.mrb[0].mxu0
        %1492 = vmatprep.mubr.f32.mxu0 0.0
        %1493 = vmatmul.mubr.f32.gmra.mrb[0].mxu0 %v1375
        %v1494 = vpop.f32.mrb[0].mxu0
        %v1495 = vadd.f32 0.0, %v1494
        %v1496 = vpop.f32.mrb[0].mxu0
        %1497 = vmatprep.mubr.f32.mxu0 0.0
        %1498 = vmatmul.mubr.f32.gmra.mrb[0].mxu0 %v1378
        %v1499 = vpop.f32.mrb[0].mxu0
        %v1500 = vadd.f32 0.0, %v1499
        %v1501 = vpop.f32.mrb[0].mxu0
        %1502 = vmatprep.mubr.f32.mxu0 0.0
        %1503 = vmatmul.mubr.f32.gmra.mrb[0].mxu0 %v1381
        %v1504 = vpop.f32.mrb[0].mxu0
        %v1505 = vadd.f32 0.0, %v1504
        %v1506 = vpop.f32.mrb[0].mxu0
        %1507 = vmatprep.mubr.f32.mxu0 0.0
        %1508 = vmatmul.mubr.f32.gmra.mrb[0].mxu0 %v1384
        %v1509 = vpop.f32.mrb[0].mxu0
        %v1510 = vadd.f32 0.0, %v1509
        %v1511 = vpop.f32.mrb[0].mxu0
        %1512 = vmatprep.mubr.f32.mxu0 0.0
        %1513 = vmatmul.mubr.f32.gmra.mrb[0].mxu0 %v1387
        %v1514 = vpop.f32.mrb[0].mxu0
        %v1515 = vadd.f32 0.0, %v1514
        %v1516 = vpop.f32.mrb[0].mxu0
        %1517 = vmatprep.mubr.f32.mxu0 0.0
        %1518 = vmatmul.mubr.f32.gmra.mrb[0].mxu0 %v1390
        %v1519 = vpop.f32.mrb[0].mxu0
        %v1520 = vadd.f32 0.0, %v1519
        %v1521 = vpop.f32.mrb[0].mxu0
        %1522 = vmatprep.mubr.f32.mxu0 0.0
        %1523 = vmatmul.mubr.f32.gmra.mrb[0].mxu0 %v1393
        %v1524 = vpop.f32.mrb[0].mxu0
        %v1525 = vadd.f32 0.0, %v1524
        %v1526 = vpop.f32.mrb[0].mxu0
        %1527 = vmatprep.mubr.f32.mxu0 0.0
        %1528 = vmatmul.mubr.f32.gmra.mrb[0].mxu0 %v1396
        %v1529 = vpop.f32.mrb[0].mxu0
        %v1530 = vadd.f32 0.0, %v1529
        %v1531 = vpop.f32.mrb[0].mxu0
        %1532 = vmatprep.mubr.f32.mxu0 0.0
        %1533 = vmatmul.mubr.f32.gmra.mrb[0].mxu0 %v1399
        %v1534 = vpop.f32.mrb[0].mxu0
        %v1535 = vadd.f32 0.0, %v1534
        %v1536 = vpop.f32.mrb[0].mxu0
        %1537 = vmatprep.mubr.f32.mxu0 0.0
        %1538 = vmatmul.mubr.f32.gmra.mrb[0].mxu0 %v1402
        %v1539 = vpop.f32.mrb[0].mxu0
        %v1540 = vadd.f32 0.0, %v1539
        %v1541 = vpop.f32.mrb[0].mxu0
        %1542 = vmatprep.mubr.f32.mxu0 0.0
        %1543 = vmatmul.mubr.f32.gmra.mrb[0].mxu0 %v1405
        %v1544 = vpop.f32.mrb[0].mxu0
        %v1545 = vadd.f32 0.0, %v1544
        %v1546 = vpop.f32.mrb[0].mxu0
        %1547 = vmatprep.mubr.f32.mxu0 0.0
        %1548 = vmatmul.mubr.f32.gmra.mrb[0].mxu0 %v1408
        %v1549 = vpop.f32.mrb[0].mxu0
        %v1550 = vadd.f32 0.0, %v1549
        %v1551 = vpop.f32.mrb[0].mxu0
        %1552 = vmatprep.mubr.f32.mxu0 0.0
        %1553 = vmatmul.mubr.f32.gmra.mrb[0].mxu0 %v1411
        %v1554 = vpop.f32.mrb[0].mxu0
        %v1555 = vadd.f32 0.0, %v1554
        %v1556 = vpop.f32.mrb[0].mxu0
        %1557 = vdwg.mxu0
        %1574 = vrot.lane.b32.xlu0 %v787, 96
        %v1575 = vpop.permute.xlu0 %1574
        %1576 = vrot.lane.b32.xlu0 %v790, 96
        %v1577 = vpop.permute.xlu0 %1576
        %1578 = vrot.lane.b32.xlu0 %v795, 96
        %v1579 = vpop.permute.xlu0 %1578
        %1580 = vrot.lane.b32.xlu0 %v798, 96
        %v1581 = vpop.permute.xlu0 %1580
        %1582 = vrot.lane.b32.xlu0 %v803, 96
        %v1583 = vpop.permute.xlu0 %1582
        %1584 = vrot.lane.b32.xlu0 %v806, 96
        %v1585 = vpop.permute.xlu0 %1584
        %1586 = vrot.lane.b32.xlu0 %v811, 96
        %v1587 = vpop.permute.xlu0 %1586
        %1588 = vrot.lane.b32.xlu0 %v814, 96
        %v1589 = vpop.permute.xlu0 %1588
        %1590 = vrot.lane.b32.xlu0 %v819, 96
        %v1591 = vpop.permute.xlu0 %1590
        %1592 = vrot.lane.b32.xlu0 %v822, 96
        %v1593 = vpop.permute.xlu0 %1592
        %1594 = vrot.lane.b32.xlu0 %v827, 96
        %v1595 = vpop.permute.xlu0 %1594
        %1596 = vrot.lane.b32.xlu0 %v830, 96
        %v1597 = vpop.permute.xlu0 %1596
        %1598 = vrot.lane.b32.xlu0 %v835, 96
        %v1599 = vpop.permute.xlu0 %1598
        %1600 = vrot.lane.b32.xlu0 %v838, 96
        %v1601 = vpop.permute.xlu0 %1600
        %1602 = vrot.lane.b32.xlu0 %v843, 96
        %v1603 = vpop.permute.xlu0 %1602
        %1604 = vrot.lane.b32.xlu0 %v846, 96
        %v1605 = vpop.permute.xlu0 %1604
        %v1622 = vmul.f32 %v1480, %v1575
        %v1623 = vmul.f32 %v1485, %v1577
        %v1624 = vmul.f32 %v1490, %v1579
        %v1625 = vmul.f32 %v1495, %v1581
        %v1626 = vmul.f32 %v1500, %v1583
        %v1627 = vmul.f32 %v1505, %v1585
        %v1628 = vmul.f32 %v1510, %v1587
        %v1629 = vmul.f32 %v1515, %v1589
        %v1630 = vmul.f32 %v1520, %v1591
        %v1631 = vmul.f32 %v1525, %v1593
        %v1632 = vmul.f32 %v1530, %v1595
        %v1633 = vmul.f32 %v1535, %v1597
        %v1634 = vmul.f32 %v1540, %v1599
        %v1635 = vmul.f32 %v1545, %v1601
        %v1636 = vmul.f32 %v1550, %v1603
        %v1637 = vmul.f32 %v1555, %v1605
        %v1638 = vpack.c.bf16 %v1623, %v1622
        %v1639 = vpack.c.bf16 %v1625, %v1624
        %v1640 = vpack.c.bf16 %v1627, %v1626
        %v1641 = vpack.c.bf16 %v1629, %v1628
        %v1642 = vpack.c.bf16 %v1631, %v1630
        %v1643 = vpack.c.bf16 %v1633, %v1632
        %v1644 = vpack.c.bf16 %v1635, %v1634
        %v1645 = vpack.c.bf16 %v1637, %v1636
        %1646 = vxpose.xlu0.c.b16.start [1/8] %v478, 128
        %1647 = vxpose.xlu0.c.b16.cont [2/8] %v479, 128
        %1648 = vxpose.xlu0.c.b16.cont [3/8] %v480, 128
        %1649 = vxpose.xlu0.c.b16.cont [4/8] %v481, 128
        %1650 = vxpose.xlu0.c.b16.cont [5/8] %v482, 128
        %1651 = vxpose.xlu0.c.b16.cont [6/8] %v483, 128
        %1652 = vxpose.xlu0.c.b16.cont [7/8] %v484, 128
        %1653 = vxpose.xlu0.c.b16.end [8/8] %v485, 128
        %v1654 = vpop.trf.xlu0
        %v1655 = vpop.trf.xlu0
        %v1656 = vpop.trf.xlu0
        %v1657 = vpop.trf.xlu0
        %v1658 = vpop.trf.xlu0
        %v1659 = vpop.trf.xlu0
        %v1660 = vpop.trf.xlu0
        %v1661 = vpop.trf.xlu0
        %1662 = vmatprep.subr.bf16.mxu0 0
        %1663 = vmatpush1.bf16.msra.mxu0 %v1638
        %1664 = vmatprep.subr.bf16.mxu0 0
        %1665 = vmatpush1.bf16.msra.mxu0 %v1639
        %1666 = vmatprep.subr.bf16.mxu0 0
        %1667 = vmatpush1.bf16.msra.mxu0 %v1640
        %1668 = vmatprep.subr.bf16.mxu0 0
        %1669 = vmatpush1.bf16.msra.mxu0 %v1641
        %1670 = vmatprep.subr.bf16.mxu0 0
        %1671 = vmatpush1.bf16.msra.mxu0 %v1642
        %1672 = vmatprep.subr.bf16.mxu0 0
        %1673 = vmatpush1.bf16.msra.mxu0 %v1643
        %1674 = vmatprep.subr.bf16.mxu0 0
        %1675 = vmatpush1.bf16.msra.mxu0 %v1644
        %1676 = vmatprep.subr.bf16.mxu0 0
        %1677 = vmatpush1.bf16.msra.mxu0 %v1645
        %1678 = vmatprep.subr.bf16.mxu0 0
        %1679 = vmatpush1.bf16.msra.mxu0 0
        %1680 = vmatprep.subr.bf16.mxu0 0
        %1681 = vmatpush1.bf16.msra.mxu0 0
        %1682 = vmatprep.subr.bf16.mxu0 0
        %1683 = vmatpush1.bf16.msra.mxu0 0
        %1684 = vmatprep.subr.bf16.mxu0 0
        %1685 = vmatpush1.bf16.msra.mxu0 0
        %1686 = vmatprep.subr.bf16.mxu0 0
        %1687 = vmatpush1.bf16.msra.mxu0 0
        %1688 = vmatprep.subr.bf16.mxu0 0
        %1689 = vmatpush1.bf16.msra.mxu0 0
        %1690 = vmatprep.subr.bf16.mxu0 0
        %1691 = vmatpush1.bf16.msra.mxu0 0
        %1692 = vmatprep.subr.bf16.mxu0 0
        %1693 = vmatpush1.bf16.msra.mxu0 0
        %1694 = vmatprep.mubr.bf16.mxu0 0
        %1695 = vmatmul.mubr.bf16.gmra.mrb[0].mxu0 %v1654
        %v1696 = vpop.f32.mrb[0].mxu0
        %v1697 = vadd.f32 0.0, %v1696
        %v1698 = vpop.f32.mrb[0].mxu0
        %v1699 = vpop.f32.mrb[0].mxu0
        %v1700 = vadd.f32 0.0, %v1699
        %v1701 = vpop.f32.mrb[0].mxu0
        %1702 = vdwg.mxu0
        %v1703 = vpack.c.bf16 %v1336, %v1334
        %v1704 = vpack.c.bf16 %v1340, %v1338
        %v1705 = vpack.c.bf16 %v1344, %v1342
        %v1706 = vpack.c.bf16 %v1348, %v1346
        %v1707 = vpack.c.bf16 %v1352, %v1350
        %v1708 = vpack.c.bf16 %v1356, %v1354
        %v1709 = vpack.c.bf16 %v1360, %v1358
        %v1710 = vpack.c.bf16 %v1364, %v1362
        %1711 = vmatprep.subr.bf16.mxu0 0
        %1712 = vmatpush1.bf16.msra.mxu0 %v1703
        %1713 = vmatprep.subr.bf16.mxu0 0
        %1714 = vmatpush1.bf16.msra.mxu0 %v1704
        %1715 = vmatprep.subr.bf16.mxu0 0
        %1716 = vmatpush1.bf16.msra.mxu0 %v1705
        %1717 = vmatprep.subr.bf16.mxu0 0
        %1718 = vmatpush1.bf16.msra.mxu0 %v1706
        %1719 = vmatprep.subr.bf16.mxu0 0
        %1720 = vmatpush1.bf16.msra.mxu0 %v1707
        %1721 = vmatprep.subr.bf16.mxu0 0
        %1722 = vmatpush1.bf16.msra.mxu0 %v1708
        %1723 = vmatprep.subr.bf16.mxu0 0
        %1724 = vmatpush1.bf16.msra.mxu0 %v1709
        %1725 = vmatprep.subr.bf16.mxu0 0
        %1726 = vmatpush1.bf16.msra.mxu0 %v1710
        %1727 = vmatprep.subr.bf16.mxu0 0
        %1728 = vmatpush1.bf16.msra.mxu0 0
        %1729 = vmatprep.subr.bf16.mxu0 0
        %1730 = vmatpush1.bf16.msra.mxu0 0
        %1731 = vmatprep.subr.bf16.mxu0 0
        %1732 = vmatpush1.bf16.msra.mxu0 0
        %1733 = vmatprep.subr.bf16.mxu0 0
        %1734 = vmatpush1.bf16.msra.mxu0 0
        %1735 = vmatprep.subr.bf16.mxu0 0
        %1736 = vmatpush1.bf16.msra.mxu0 0
        %1737 = vmatprep.subr.bf16.mxu0 0
        %1738 = vmatpush1.bf16.msra.mxu0 0
        %1739 = vmatprep.subr.bf16.mxu0 0
        %1740 = vmatpush1.bf16.msra.mxu0 0
        %1741 = vmatprep.subr.bf16.mxu0 0
        %1742 = vmatpush1.bf16.msra.mxu0 0
        %1743 = vmatprep.mubr.bf16.mxu0 0
        %1744 = vmatmul.mubr.bf16.gmra.mrb[0].mxu0 %v1654
        %v1745 = vpop.f32.mrb[0].mxu0
        %v1746 = vadd.f32 0.0, %v1745
        %v1747 = vpop.f32.mrb[0].mxu0
        %v1748 = vpop.f32.mrb[0].mxu0
        %v1749 = vadd.f32 0.0, %v1748
        %v1750 = vpop.f32.mrb[0].mxu0
        %1751 = vdwg.mxu0
        %v1752 = vld [vmem:[#allocation3] sm:$0xff]
        %v1753 = vld [vmem:[#allocation3 + $0x8] sm:$0xff]
        %v1754 = vlaneseq
        %v1755 = vshrl.u32 %v1754, 7
        %v1756 = vsub.s32 0, %v1755
        %v1757 = vrot.slane %v1310, %v1756
        %v1758 = vmul.f32 %v1757, %v1752
        %v1759 = vmul.f32 %v1757, %v1753
        %v1760 = vadd.f32 %v1758, %v1697
        %v1761 = vadd.f32 %v1759, %v1700
        %1762 = vst.msk [vmem:[#allocation3] sm:$0xff] %vm885, %v1760
        %1763 = vst.msk [vmem:[#allocation3 + $0x8] sm:$0xff] %vm885, %v1761
        %v1764 = vld [vmem:[%s8] sm:$0xff]
        %v1765 = vld [vmem:[%s8 + $0x8] sm:$0xff]
        %v1766 = vlaneseq
        %v1767 = vshrl.u32 %v1766, 7
        %v1768 = vsub.s32 0, %v1767
        %v1769 = vrot.slane %v1234, %v1768
        %v1770 = vmul.f32 %v1769, %v1764
        %v1771 = vmul.f32 %v1769, %v1765
        %v1772 = vadd.f32 %v1770, %v1746
        %v1773 = vadd.f32 %v1771, %v1749
        %1774 = vst.msk [vmem:[%s8] sm:$0xff] %vm1191, %v1772
        %1775 = vst.msk [vmem:[%s8 + $0x8] sm:$0xff] %vm1191, %v1773
        // Predicated region
        $region53: #{tpu_custom_call.1} parent=47 // pred_check
          %p1776 = pneg %p196
        $region54: #{tpu_custom_call.1} parent=47 // pred_check_branch
          %1778 = sbr.rel (%p1776) target = $region56
        $region55: #{tpu_custom_call.1} parent=47 // pred_region
          %s1780 = ssub.s32 256, 256
          %1781 = vsyncadd [#allocation4], %s1780
          %s1782 = sshll.u32 [#allocation3], 4
          %s1783 = int_to_ptr.vmem [resolvable:$true] %s1782
          %1788 = dma.vmem_to_hbm [thread:$0]  %s1783, 256, %s7, [#allocation4], 128, 128, 8
        $region56: #{tpu_custom_call.1} parent=47 // pred_fallthru
          _
        // Predicated region
        $region57: #{tpu_custom_call.1} parent=47 // pred_check
          %p1789 = pneg %p217
        $region58: #{tpu_custom_call.1} parent=47 // pred_check_branch
          %1791 = sbr.rel (%p1789) target = $region60
        $region59: #{tpu_custom_call.1} parent=47 // pred_region
          _
        $region60: #{tpu_custom_call.1} parent=47 // pred_fallthru
          _
        // Predicated region
        $region61: #{tpu_custom_call.1} parent=47 // pred_check
          %p1792 = pneg %p196
        $region62: #{tpu_custom_call.1} parent=47 // pred_check_branch
          %1794 = sbr.rel (%p1792) target = $region64
        $region63: #{tpu_custom_call.1} parent=47 // pred_region
          %1795 = dma.done [#allocation4], 256
        $region64: #{tpu_custom_call.1} parent=47 // pred_fallthru
          _
        // Predicated region
        $region65: #{tpu_custom_call.1} parent=47 // pred_check
          %p1796 = pneg %p217
        $region66: #{tpu_custom_call.1} parent=47 // pred_check_branch
          %1798 = sbr.rel (%p1796) target = $region68
        $region67: #{tpu_custom_call.1} parent=47 // pred_region
          _
        $region68: #{tpu_custom_call.1} parent=47 // pred_fallthru
          _
      $region48: #{tpu_custom_call.1} parent=5 // pred_fallthru
        _
      %p1799 = scmp.le.s32.totalorder 2, %s16
      // Predicated region
      $region69: #{tpu_custom_call.1} parent=5 // pred_check
        %p1800 = pneg %p1799
      $region70: #{tpu_custom_call.1} parent=5 // pred_check_branch
        %1802 = sbr.rel (%p1800) target = $region72
      $region71: #{tpu_custom_call.1} parent=5 // pred_region
        %s1803 = ssub.s32 %s16, 2
      $region72: #{tpu_custom_call.1} parent=5 // pred_fallthru
        _
    $region6: #{tpu_custom_call.1} parent=1 // loop_footer
      %s20 = sadd.s32 1, %s16
    $region7: #{tpu_custom_call.1} parent=1 // loop_footer_branch
      %15 = sbr.rel target = $region3
    $region8: #{tpu_custom_call.1} parent=1 // loop_exit
      _
    %1804 = vsyncpa [#allocation4], 1
    %s1805 = scalar_lea.sflag [#allocation4], 1
    %1806 = vsyncpa %s1805, 1

</llo_original>
